<compile_context>
chip_gen: v6e
topology: v6e:2x2x1
jax: 0.10.0
libtpu: 0.0.40
codegen_flags: <defaults>
</compile_context>

<pallas_src>
import functools

import jax
import jax.numpy as jnp
from jax.experimental import pallas as pl
from jax.experimental.pallas import tpu as pltpu

EXPANSION = 4


# ------------------------------ configuration ------------------------------ #

def _default_vmem_limit():
    # Raise the scoped-VMEM limit above the 16/32 MiB defaults, but stay well
    # under physical capacity (v7x only has 64 MiB per TensorCore -> 48 MiB).
    try:
        cap = pltpu.get_tpu_info().vmem_capacity_bytes
        return int(min(cap * 3 // 4, 96 * 1024 * 1024))
    except Exception:
        return 48 * 1024 * 1024


_VMEM_LIMIT = _default_vmem_limit()


def _mosaic_params():
    return pltpu.CompilerParams(
        dimension_semantics=("parallel",),
        vmem_limit_bytes=_VMEM_LIMIT,
    )


# ------------------------------ fused kernel ------------------------------- #

def _bottleneck_kernel(*args, n_src, src_shapes, taps, Ho, Wo,
                       conv_sc, emit_pre):
    """Whole bottleneck block for one image; everything stays in VMEM/vregs."""
    x_refs = args[:n_src]
    i = n_src
    r_ref, w1_ref, sb1_ref, w2_ref, sb2_ref, w3_ref = args[i:i + 6]
    i += 6
    if conv_sc:
        wsc_ref, sbsc_ref = args[i:i + 2]
        i += 2
    sb3_ref = args[i]
    i += 1
    if emit_pre:
        out_ref, pre_ref = args[i:i + 2]
    else:
        out_ref = args[i]

    planes = w1_ref.shape[1]
    w1 = w1_ref[...]

    # conv1 (1x1) + bn1 + relu per (padded / parity-subsampled) source plane.
    # bf16 operands feed the MXU directly; f32 results stay in VMEM.  Widths
    # are padded to a multiple of 8, so the reshape below is a layout no-op.
    a_planes = []
    for r, (hs, ws) in zip(x_refs, src_shapes):
        a = jnp.dot(r[0], w1, preferred_element_type=jnp.float32)
        a = jnp.maximum(a * sb1_ref[0:1, :] + sb1_ref[1:2, :], 0.0)
        a_planes.append(a.reshape(hs, ws, planes))

    # conv2 (3x3, pad=1, any stride): nine shifted-slice matmuls, f32 accum.
    acc = None
    for t, (s, ka, kb) in enumerate(taps):
        patch = a_planes[s][ka:ka + Ho, kb:kb + Wo, :].reshape(Ho * Wo, planes)
        d = jnp.dot(patch.astype(jnp.bfloat16), w2_ref[t],
                    preferred_element_type=jnp.float32)
        acc = d if acc is None else acc + d
    a2 = jnp.maximum(acc * sb2_ref[0:1, :] + sb2_ref[1:2, :],
                     0.0).astype(jnp.bfloat16)

    # conv3 (1x1) + bn3 + shortcut (+ relu).
    y = jnp.dot(a2, w3_ref[...], preferred_element_type=jnp.float32)
    y = y * sb3_ref[0:1, :] + sb3_ref[1:2, :]
    if conv_sc:
        ysc = jnp.dot(r_ref[0], wsc_ref[...],
                      preferred_element_type=jnp.float32)
        y = y + (ysc * sbsc_ref[0:1, :] + sbsc_ref[1:2, :])
    else:
        y = y + r_ref[0].astype(jnp.float32)

    if emit_pre:
        pre_ref[0] = y.astype(pre_ref.dtype)
    out_ref[0] = jnp.maximum(y, 0.0).astype(out_ref.dtype)


def _run_fused_bottleneck(srcs, src_shapes, res, w1, sb1, w2, sb2, w3, sb3,
                          wsc, sbsc, *, taps, Ho, Wo, emit_pre):
    N = res.shape[0]
    cout = w3.shape[1]
    conv_sc = wsc is not None

    in_arrays = list(srcs) + [res, w1, sb1, w2, sb2, w3]
    in_specs = [pl.BlockSpec((1,) + tuple(s.shape[1:]), lambda n: (n, 0, 0))
                for s in srcs]
    in_specs.append(
        pl.BlockSpec((1,) + tuple(res.shape[1:]), lambda n: (n, 0, 0)))
    in_specs += [
        pl.BlockSpec(w1.shape, lambda n: (0, 0)),
        pl.BlockSpec(sb1.shape, lambda n: (0, 0)),
        pl.BlockSpec(w2.shape, lambda n: (0, 0, 0)),
        pl.BlockSpec(sb2.shape, lambda n: (0, 0)),
        pl.BlockSpec(w3.shape, lambda n: (0, 0)),
    ]
    if conv_sc:
        in_arrays += [wsc, sbsc]
        in_specs += [pl.BlockSpec(wsc.shape, lambda n: (0, 0)),
                     pl.BlockSpec(sbsc.shape, lambda n: (0, 0))]
    in_arrays.append(sb3)
    in_specs.append(pl.BlockSpec(sb3.shape, lambda n: (0, 0)))

    out_block = pl.BlockSpec((1, Ho * Wo, cout), lambda n: (n, 0, 0))
    if emit_pre:
        out_shape = (jax.ShapeDtypeStruct((N, Ho * Wo, cout), jnp.bfloat16),
                     jax.ShapeDtypeStruct((N, Ho * Wo, cout), jnp.float32))
        out_specs = (out_block, out_block)
    else:
        out_shape = jax.ShapeDtypeStruct((N, Ho * Wo, cout), jnp.bfloat16)
        out_specs = out_block

    kernel = functools.partial(
        _bottleneck_kernel, n_src=len(srcs), src_shapes=tuple(src_shapes),
        taps=taps, Ho=Ho, Wo=Wo, conv_sc=conv_sc, emit_pre=emit_pre)

    result = pl.pallas_call(
        kernel, out_shape=out_shape, grid=(N,),
        in_specs=in_specs, out_specs=out_specs,
        compiler_params=_mosaic_params(),
    )(*in_arrays)

    if emit_pre:
        return result
    return result, None


# ------------------------------- JAX glue ----------------------------------- #

def _bn_fold(bn, eps=1e-5):
    gamma, beta, mean, var = bn
    scale = gamma / jnp.sqrt(var + eps)
    shift = beta - mean * scale
    return jnp.stack([scale, shift]).astype(jnp.float32)   # (2, C)


def init_bottleneck_params(key, in_planes, planes, stride):
    keys = jax.random.split(key, 8)

    def conv(k, cin, cout, kh, kw):
        return 0.1 * jax.random.normal(k, (cout, cin, kh, kw), jnp.float32)

    def bn(k, c):
        k1, k2, k3 = jax.random.split(k, 3)
        gamma = 1.0 + 0.1 * jax.random.normal(k1, (c,), jnp.float32)
        beta = 0.1 * jax.random.normal(k2, (c,), jnp.float32)
        mean = 0.1 * jax.random.normal(k3, (c,), jnp.float32)
        var = jnp.ones((c,), jnp.float32)
        return (gamma, beta, mean, var)

    p = dict(
        conv1=conv(keys[0], in_planes, planes, 1, 1),
        bn1=bn(keys[1], planes),
        conv2=conv(keys[2], planes, planes, 3, 3),
        bn2=bn(keys[3], planes),
        conv3=conv(keys[4], planes, EXPANSION * planes, 1, 1),
        bn3=bn(keys[5], EXPANSION * planes),
    )
    if stride != 1 or in_planes != EXPANSION * planes:
        p["conv_sc"] = conv(keys[6], in_planes, EXPANSION * planes, 1, 1)
        p["bn_sc"] = bn(keys[7], EXPANSION * planes)
    return p


def bottleneck_forward(x_nchw, params, stride=1, is_last=False):
    # Single NCHW->NHWC transpose + cast to bf16 (no f32 NHWC copy).
    x = jnp.transpose(x_nchw, (0, 2, 3, 1)).astype(jnp.bfloat16)
    N, H, W, Cin = x.shape

    sb1 = _bn_fold(params["bn1"])
    sb2 = _bn_fold(params["bn2"])
    sb3 = _bn_fold(params["bn3"])

    w1 = params["conv1"][:, :, 0, 0].T.astype(jnp.bfloat16)          # (Cin, P)
    planes = w1.shape[1]
    w2 = jnp.transpose(params["conv2"], (2, 3, 1, 0)).reshape(
        9, planes, planes).astype(jnp.bfloat16)                      # (9, P, P)
    w3 = params["conv3"][:, :, 0, 0].T.astype(jnp.bfloat16)          # (P, 4P)
    cout = w3.shape[1]

    Ho = (H - 1) // stride + 1
    Wo = (W - 1) // stride + 1

    # Padded (and, for stride>1, parity-decomposed) conv2 source planes.
    # Widths rounded up to a multiple of 8 (zero fill, never read by the taps)
    # so in-kernel reshapes are layout no-ops; planes handed over pre-flattened
    # to (N, hs*ws, Cin) so the kernel feeds them straight into the conv1 dot.
    xp = jnp.pad(x, ((0, 0), (1, 1), (1, 1), (0, 0)))
    srcs, src_shapes = [], []
    for p in range(stride):
        for q in range(stride):
            sp = xp[:, p::stride, q::stride, :]
            hs, ws = sp.shape[1], sp.shape[2]
            ws_pad = ((ws + 7) // 8) * 8
            if ws_pad != ws:
                sp = jnp.pad(sp, ((0, 0), (0, 0), (0, ws_pad - ws), (0, 0)))
            srcs.append(sp.reshape(N, hs * ws_pad, Cin))
            src_shapes.append((hs, ws_pad))
    taps = tuple(((kh % stride) * stride + (kw % stride),
                  kh // stride, kw // stride)
                 for kh in range(3) for kw in range(3))

    if "conv_sc" in params:
        sbsc = _bn_fold(params["bn_sc"])
        wsc = params["conv_sc"][:, :, 0, 0].T.astype(jnp.bfloat16)   # (Cin, 4P)
        res = x[:, ::stride, ::stride, :].reshape(N, Ho * Wo, Cin)
    else:
        assert stride == 1 and Cin == cout, (
            "identity shortcut requires stride == 1 and in_planes == 4*planes")
        wsc, sbsc = None, None
        res = x.reshape(N, Ho * Wo, Cin)

    out, pre = _run_fused_bottleneck(
        srcs, src_shapes, res, w1, sb1, w2, sb2, w3, sb3, wsc, sbsc,
        taps=taps, Ho=Ho, Wo=Wo, emit_pre=is_last)

    out = jnp.transpose(out.reshape(N, Ho, Wo, cout), (0, 3, 1, 2))
    if is_last:
        pre = jnp.transpose(pre.reshape(N, Ho, Wo, cout), (0, 3, 1, 2))
        return out, pre
    return out


# ------------------------- pure-JAX reference (check) ----------------------- #

def _ref_forward(x, params, stride, eps=1e-5):
    def conv(x, w, stride=1, padding="VALID"):
        return jax.lax.conv_general_dilated(
            x, w, (stride, stride), padding,
            dimension_numbers=("NCHW", "OIHW", "NCHW"))

    def bn(x, p):
        g, b, m, v = p
        inv = 1.0 / jnp.sqrt(v + eps)
        return ((x - m[None, :, None, None]) * inv[None, :, None, None]
                * g[None, :, None, None] + b[None, :, None, None])

    out = jax.nn.relu(bn(conv(x, params["conv1"]), params["bn1"]))
    out = jax.nn.relu(bn(conv(out, params["conv2"], stride, [(1, 1), (1, 1)]),
                         params["bn2"]))
    out = bn(conv(out, params["conv3"]), params["bn3"])
    if "conv_sc" in params:
        sc = bn(conv(x, params["conv_sc"], stride), params["bn_sc"])
    else:
        sc = x
    pre = out + sc
    return jax.nn.relu(pre), pre


# ---------------------------------- main ------------------------------------ #

if __name__ == "__main__":
    key = jax.random.PRNGKey(0)
    k_x1, k_p1, k_x2, k_p2 = jax.random.split(key, 4)

    TOL = dict(atol=3e-2, rtol=3e-2)  # bf16 MXU operands / bf16 block output

    # Config 1: downsampling block (conv shortcut, stride 2), is_last=True.
    in_planes, planes, stride = 8, 4, 2
    x1 = jax.random.normal(k_x1, (2, in_planes, 16, 16), jnp.float32)
    p1 = init_bottleneck_params(k_p1, in_planes, planes, stride)
    fwd1 = jax.jit(functools.partial(bottleneck_forward, stride=stride,
                                     is_last=True))
    out1, pre1 = fwd1(x1, p1)
    out1 = jax.block_until_ready(out1)
    pre1 = jax.block_until_ready(pre1)
    r_out1, r_pre1 = _ref_forward(x1, p1, stride)
    assert out1.shape == (2, EXPANSION * planes, 8, 8)
    assert jnp.allclose(out1.astype(jnp.float32), r_out1, **TOL)
    assert jnp.allclose(pre1, r_pre1, **TOL)

    # Config 2: identity-shortcut block (stride 1, in_planes == 4*planes).
    in_planes2, planes2, stride2 = 16, 4, 1
    x2 = jax.random.normal(k_x2, (2, in_planes2, 16, 16), jnp.float32)
    p2 = init_bottleneck_params(k_p2, in_planes2, planes2, stride2)
    fwd2 = jax.jit(functools.partial(bottleneck_forward, stride=stride2,
                                     is_last=False))
    out2 = jax.block_until_ready(fwd2(x2, p2))
    r_out2, _ = _ref_forward(x2, p2, stride2)
    assert out2.shape == (2, EXPANSION * planes2, 16, 16)
    assert jnp.allclose(out2.astype(jnp.float32), r_out2, **TOL)

    print("KERNEL_OK")
</pallas_src>

<mosaic_0001>
module attributes {stable_mosaic.version = 11 : i64} {
  func.func @_bottleneck_kernel(%arg0: i32, %arg1: memref<1x144x8xbf16, #tpu.memory_space<vmem>>, %arg2: memref<1x144x8xbf16, #tpu.memory_space<vmem>>, %arg3: memref<1x144x8xbf16, #tpu.memory_space<vmem>>, %arg4: memref<1x144x8xbf16, #tpu.memory_space<vmem>>, %arg5: memref<1x64x8xbf16, #tpu.memory_space<vmem>>, %arg6: memref<8x4xbf16, #tpu.memory_space<vmem>>, %arg7: memref<2x4xf32, #tpu.memory_space<vmem>>, %arg8: memref<9x4x4xbf16, #tpu.memory_space<vmem>>, %arg9: memref<2x4xf32, #tpu.memory_space<vmem>>, %arg10: memref<4x16xbf16, #tpu.memory_space<vmem>>, %arg11: memref<8x16xbf16, #tpu.memory_space<vmem>>, %arg12: memref<2x16xf32, #tpu.memory_space<vmem>>, %arg13: memref<2x16xf32, #tpu.memory_space<vmem>>, %arg14: memref<1x64x16xbf16, #tpu.memory_space<vmem>>, %arg15: memref<1x64x16xf32, #tpu.memory_space<vmem>>) attributes {dimension_semantics = [#tpu.dimension_semantics<parallel>], iteration_bounds = array<i64: 2>, scalar_prefetch = 0 : i64, scratch_operands = 0 : i64, tpu.core_type = #tpu.core_type<tc>, window_params = [{transform_indices = @transform_0, window_bounds = array<i64: 1, 144, 8>}, {transform_indices = @transform_1, window_bounds = array<i64: 1, 144, 8>}, {transform_indices = @transform_2, window_bounds = array<i64: 1, 144, 8>}, {transform_indices = @transform_3, window_bounds = array<i64: 1, 144, 8>}, {transform_indices = @transform_4, window_bounds = array<i64: 1, 64, 8>}, {pipeline_mode = #tpu.pipeline_mode<synchronous>, transform_indices = @transform_5, window_bounds = array<i64: 8, 4>}, {pipeline_mode = #tpu.pipeline_mode<synchronous>, transform_indices = @transform_6, window_bounds = array<i64: 2, 4>}, {pipeline_mode = #tpu.pipeline_mode<synchronous>, transform_indices = @transform_7, window_bounds = array<i64: 9, 4, 4>}, {pipeline_mode = #tpu.pipeline_mode<synchronous>, transform_indices = @transform_8, window_bounds = array<i64: 2, 4>}, {pipeline_mode = #tpu.pipeline_mode<synchronous>, transform_indices = @transform_9, window_bounds = array<i64: 4, 16>}, {pipeline_mode = #tpu.pipeline_mode<synchronous>, transform_indices = @transform_10, window_bounds = array<i64: 8, 16>}, {pipeline_mode = #tpu.pipeline_mode<synchronous>, transform_indices = @transform_11, window_bounds = array<i64: 2, 16>}, {pipeline_mode = #tpu.pipeline_mode<synchronous>, transform_indices = @transform_12, window_bounds = array<i64: 2, 16>}, {transform_indices = @transform_13, window_bounds = array<i64: 1, 64, 16>}, {transform_indices = @transform_14, window_bounds = array<i64: 1, 64, 16>}]} {
    %c0 = arith.constant 0 : index
    %c0_0 = arith.constant 0 : index
    %0 = vector.load %arg6[%c0, %c0_0] : memref<8x4xbf16, #tpu.memory_space<vmem>>, vector<8x4xbf16>
    %c0_1 = arith.constant 0 : index
    %c0_2 = arith.constant 0 : index
    %c0_3 = arith.constant 0 : index
    %1 = vector.load %arg1[%c0_1, %c0_2, %c0_3] : memref<1x144x8xbf16, #tpu.memory_space<vmem>>, vector<1x144x8xbf16>
    %2 = vector.shape_cast %1 : vector<1x144x8xbf16> to vector<144x8xbf16>
    %cst = arith.constant dense<0.000000e+00> : vector<144x4xf32>
    %3 = tpu.matmul %2, %0, %cst {dimension_numbers = #tpu.dot_dimension_numbers<[1], [0], [0], [1], [0, 0, 1, 1], [], []>} : vector<144x8xbf16>, vector<8x4xbf16>, vector<144x4xf32> -> vector<144x4xf32>
    %c0_4 = arith.constant 0 : index
    %c0_5 = arith.constant 0 : index
    %4 = vector.load %arg7[%c0_4, %c0_5] : memref<2x4xf32, #tpu.memory_space<vmem>>, vector<1x4xf32>
    %5 = vector.broadcast %4 : vector<1x4xf32> to vector<144x4xf32>
    %6 = arith.mulf %3, %5 : vector<144x4xf32>
    %c1 = arith.constant 1 : index
    %c0_6 = arith.constant 0 : index
    %7 = vector.load %arg7[%c1, %c0_6] : memref<2x4xf32, #tpu.memory_space<vmem>>, vector<1x4xf32>
    %8 = vector.broadcast %7 : vector<1x4xf32> to vector<144x4xf32>
    %9 = arith.addf %6, %8 : vector<144x4xf32>
    %cst_7 = arith.constant 0.000000e+00 : f32
    %10 = vector.broadcast %cst_7 : f32 to vector<144x4xf32>
    %11 = arith.maximumf %9, %10 : vector<144x4xf32>
    %12 = vector.shape_cast %11 : vector<144x4xf32> to vector<9x16x4xf32>
    %c0_8 = arith.constant 0 : index
    %c0_9 = arith.constant 0 : index
    %c0_10 = arith.constant 0 : index
    %13 = vector.load %arg2[%c0_8, %c0_9, %c0_10] : memref<1x144x8xbf16, #tpu.memory_space<vmem>>, vector<1x144x8xbf16>
    %14 = vector.shape_cast %13 : vector<1x144x8xbf16> to vector<144x8xbf16>
    %cst_11 = arith.constant dense<0.000000e+00> : vector<144x4xf32>
    %15 = tpu.matmul %14, %0, %cst_11 {dimension_numbers = #tpu.dot_dimension_numbers<[1], [0], [0], [1], [0, 0, 1, 1], [], []>} : vector<144x8xbf16>, vector<8x4xbf16>, vector<144x4xf32> -> vector<144x4xf32>
    %c0_12 = arith.constant 0 : index
    %c0_13 = arith.constant 0 : index
    %16 = vector.load %arg7[%c0_12, %c0_13] : memref<2x4xf32, #tpu.memory_space<vmem>>, vector<1x4xf32>
    %17 = vector.broadcast %16 : vector<1x4xf32> to vector<144x4xf32>
    %18 = arith.mulf %15, %17 : vector<144x4xf32>
    %c1_14 = arith.constant 1 : index
    %c0_15 = arith.constant 0 : index
    %19 = vector.load %arg7[%c1_14, %c0_15] : memref<2x4xf32, #tpu.memory_space<vmem>>, vector<1x4xf32>
    %20 = vector.broadcast %19 : vector<1x4xf32> to vector<144x4xf32>
    %21 = arith.addf %18, %20 : vector<144x4xf32>
    %cst_16 = arith.constant 0.000000e+00 : f32
    %22 = vector.broadcast %cst_16 : f32 to vector<144x4xf32>
    %23 = arith.maximumf %21, %22 : vector<144x4xf32>
    %24 = vector.shape_cast %23 : vector<144x4xf32> to vector<9x16x4xf32>
    %c0_17 = arith.constant 0 : index
    %c0_18 = arith.constant 0 : index
    %c0_19 = arith.constant 0 : index
    %25 = vector.load %arg3[%c0_17, %c0_18, %c0_19] : memref<1x144x8xbf16, #tpu.memory_space<vmem>>, vector<1x144x8xbf16>
    %26 = vector.shape_cast %25 : vector<1x144x8xbf16> to vector<144x8xbf16>
    %cst_20 = arith.constant dense<0.000000e+00> : vector<144x4xf32>
    %27 = tpu.matmul %26, %0, %cst_20 {dimension_numbers = #tpu.dot_dimension_numbers<[1], [0], [0], [1], [0, 0, 1, 1], [], []>} : vector<144x8xbf16>, vector<8x4xbf16>, vector<144x4xf32> -> vector<144x4xf32>
    %c0_21 = arith.constant 0 : index
    %c0_22 = arith.constant 0 : index
    %28 = vector.load %arg7[%c0_21, %c0_22] : memref<2x4xf32, #tpu.memory_space<vmem>>, vector<1x4xf32>
    %29 = vector.broadcast %28 : vector<1x4xf32> to vector<144x4xf32>
    %30 = arith.mulf %27, %29 : vector<144x4xf32>
    %c1_23 = arith.constant 1 : index
    %c0_24 = arith.constant 0 : index
    %31 = vector.load %arg7[%c1_23, %c0_24] : memref<2x4xf32, #tpu.memory_space<vmem>>, vector<1x4xf32>
    %32 = vector.broadcast %31 : vector<1x4xf32> to vector<144x4xf32>
    %33 = arith.addf %30, %32 : vector<144x4xf32>
    %cst_25 = arith.constant 0.000000e+00 : f32
    %34 = vector.broadcast %cst_25 : f32 to vector<144x4xf32>
    %35 = arith.maximumf %33, %34 : vector<144x4xf32>
    %36 = vector.shape_cast %35 : vector<144x4xf32> to vector<9x16x4xf32>
    %c0_26 = arith.constant 0 : index
    %c0_27 = arith.constant 0 : index
    %c0_28 = arith.constant 0 : index
    %37 = vector.load %arg4[%c0_26, %c0_27, %c0_28] : memref<1x144x8xbf16, #tpu.memory_space<vmem>>, vector<1x144x8xbf16>
    %38 = vector.shape_cast %37 : vector<1x144x8xbf16> to vector<144x8xbf16>
    %cst_29 = arith.constant dense<0.000000e+00> : vector<144x4xf32>
    %39 = tpu.matmul %38, %0, %cst_29 {dimension_numbers = #tpu.dot_dimension_numbers<[1], [0], [0], [1], [0, 0, 1, 1], [], []>} : vector<144x8xbf16>, vector<8x4xbf16>, vector<144x4xf32> -> vector<144x4xf32>
    %c0_30 = arith.constant 0 : index
    %c0_31 = arith.constant 0 : index
    %40 = vector.load %arg7[%c0_30, %c0_31] : memref<2x4xf32, #tpu.memory_space<vmem>>, vector<1x4xf32>
    %41 = vector.broadcast %40 : vector<1x4xf32> to vector<144x4xf32>
    %42 = arith.mulf %39, %41 : vector<144x4xf32>
    %c1_32 = arith.constant 1 : index
    %c0_33 = arith.constant 0 : index
    %43 = vector.load %arg7[%c1_32, %c0_33] : memref<2x4xf32, #tpu.memory_space<vmem>>, vector<1x4xf32>
    %44 = vector.broadcast %43 : vector<1x4xf32> to vector<144x4xf32>
    %45 = arith.addf %42, %44 : vector<144x4xf32>
    %cst_34 = arith.constant 0.000000e+00 : f32
    %46 = vector.broadcast %cst_34 : f32 to vector<144x4xf32>
    %47 = arith.maximumf %45, %46 : vector<144x4xf32>
    %48 = vector.shape_cast %47 : vector<144x4xf32> to vector<9x16x4xf32>
    %49 = vector.extract_strided_slice %12 {offsets = [0, 0, 0], sizes = [8, 8, 4], strides = [1, 1, 1]} : vector<9x16x4xf32> to vector<8x8x4xf32>
    %50 = vector.shape_cast %49 : vector<8x8x4xf32> to vector<64x4xf32>
    %51 = arith.truncf %50 : vector<64x4xf32> to vector<64x4xbf16>
    %c0_35 = arith.constant 0 : index
    %c0_36 = arith.constant 0 : index
    %c0_37 = arith.constant 0 : index
    %52 = vector.load %arg8[%c0_35, %c0_36, %c0_37] : memref<9x4x4xbf16, #tpu.memory_space<vmem>>, vector<1x4x4xbf16>
    %53 = vector.shape_cast %52 : vector<1x4x4xbf16> to vector<4x4xbf16>
    %cst_38 = arith.constant dense<0.000000e+00> : vector<64x4xf32>
    %54 = tpu.matmul %51, %53, %cst_38 {dimension_numbers = #tpu.dot_dimension_numbers<[1], [0], [0], [1], [0, 0, 1, 1], [], []>} : vector<64x4xbf16>, vector<4x4xbf16>, vector<64x4xf32> -> vector<64x4xf32>
    %55 = vector.extract_strided_slice %24 {offsets = [0, 0, 0], sizes = [8, 8, 4], strides = [1, 1, 1]} : vector<9x16x4xf32> to vector<8x8x4xf32>
    %56 = vector.shape_cast %55 : vector<8x8x4xf32> to vector<64x4xf32>
    %57 = arith.truncf %56 : vector<64x4xf32> to vector<64x4xbf16>
    %c1_39 = arith.constant 1 : index
    %c0_40 = arith.constant 0 : index
    %c0_41 = arith.constant 0 : index
    %58 = vector.load %arg8[%c1_39, %c0_40, %c0_41] : memref<9x4x4xbf16, #tpu.memory_space<vmem>>, vector<1x4x4xbf16>
    %59 = vector.shape_cast %58 : vector<1x4x4xbf16> to vector<4x4xbf16>
    %cst_42 = arith.constant dense<0.000000e+00> : vector<64x4xf32>
    %60 = tpu.matmul %57, %59, %cst_42 {dimension_numbers = #tpu.dot_dimension_numbers<[1], [0], [0], [1], [0, 0, 1, 1], [], []>} : vector<64x4xbf16>, vector<4x4xbf16>, vector<64x4xf32> -> vector<64x4xf32>
    %61 = arith.addf %54, %60 : vector<64x4xf32>
    %62 = vector.extract_strided_slice %12 {offsets = [0, 1, 0], sizes = [8, 8, 4], strides = [1, 1, 1]} : vector<9x16x4xf32> to vector<8x8x4xf32>
    %63 = vector.shape_cast %62 : vector<8x8x4xf32> to vector<64x4xf32>
    %64 = arith.truncf %63 : vector<64x4xf32> to vector<64x4xbf16>
    %c2 = arith.constant 2 : index
    %c0_43 = arith.constant 0 : index
    %c0_44 = arith.constant 0 : index
    %65 = vector.load %arg8[%c2, %c0_43, %c0_44] : memref<9x4x4xbf16, #tpu.memory_space<vmem>>, vector<1x4x4xbf16>
    %66 = vector.shape_cast %65 : vector<1x4x4xbf16> to vector<4x4xbf16>
    %cst_45 = arith.constant dense<0.000000e+00> : vector<64x4xf32>
    %67 = tpu.matmul %64, %66, %cst_45 {dimension_numbers = #tpu.dot_dimension_numbers<[1], [0], [0], [1], [0, 0, 1, 1], [], []>} : vector<64x4xbf16>, vector<4x4xbf16>, vector<64x4xf32> -> vector<64x4xf32>
    %68 = arith.addf %61, %67 : vector<64x4xf32>
    %69 = vector.extract_strided_slice %36 {offsets = [0, 0, 0], sizes = [8, 8, 4], strides = [1, 1, 1]} : vector<9x16x4xf32> to vector<8x8x4xf32>
    %70 = vector.shape_cast %69 : vector<8x8x4xf32> to vector<64x4xf32>
    %71 = arith.truncf %70 : vector<64x4xf32> to vector<64x4xbf16>
    %c3 = arith.constant 3 : index
    %c0_46 = arith.constant 0 : index
    %c0_47 = arith.constant 0 : index
    %72 = vector.load %arg8[%c3, %c0_46, %c0_47] : memref<9x4x4xbf16, #tpu.memory_space<vmem>>, vector<1x4x4xbf16>
    %73 = vector.shape_cast %72 : vector<1x4x4xbf16> to vector<4x4xbf16>
    %cst_48 = arith.constant dense<0.000000e+00> : vector<64x4xf32>
    %74 = tpu.matmul %71, %73, %cst_48 {dimension_numbers = #tpu.dot_dimension_numbers<[1], [0], [0], [1], [0, 0, 1, 1], [], []>} : vector<64x4xbf16>, vector<4x4xbf16>, vector<64x4xf32> -> vector<64x4xf32>
    %75 = arith.addf %68, %74 : vector<64x4xf32>
    %76 = vector.extract_strided_slice %48 {offsets = [0, 0, 0], sizes = [8, 8, 4], strides = [1, 1, 1]} : vector<9x16x4xf32> to vector<8x8x4xf32>
    %77 = vector.shape_cast %76 : vector<8x8x4xf32> to vector<64x4xf32>
    %78 = arith.truncf %77 : vector<64x4xf32> to vector<64x4xbf16>
    %c4 = arith.constant 4 : index
    %c0_49 = arith.constant 0 : index
    %c0_50 = arith.constant 0 : index
    %79 = vector.load %arg8[%c4, %c0_49, %c0_50] : memref<9x4x4xbf16, #tpu.memory_space<vmem>>, vector<1x4x4xbf16>
    %80 = vector.shape_cast %79 : vector<1x4x4xbf16> to vector<4x4xbf16>
    %cst_51 = arith.constant dense<0.000000e+00> : vector<64x4xf32>
    %81 = tpu.matmul %78, %80, %cst_51 {dimension_numbers = #tpu.dot_dimension_numbers<[1], [0], [0], [1], [0, 0, 1, 1], [], []>} : vector<64x4xbf16>, vector<4x4xbf16>, vector<64x4xf32> -> vector<64x4xf32>
    %82 = arith.addf %75, %81 : vector<64x4xf32>
    %83 = vector.extract_strided_slice %36 {offsets = [0, 1, 0], sizes = [8, 8, 4], strides = [1, 1, 1]} : vector<9x16x4xf32> to vector<8x8x4xf32>
    %84 = vector.shape_cast %83 : vector<8x8x4xf32> to vector<64x4xf32>
    %85 = arith.truncf %84 : vector<64x4xf32> to vector<64x4xbf16>
    %c5 = arith.constant 5 : index
    %c0_52 = arith.constant 0 : index
    %c0_53 = arith.constant 0 : index
    %86 = vector.load %arg8[%c5, %c0_52, %c0_53] : memref<9x4x4xbf16, #tpu.memory_space<vmem>>, vector<1x4x4xbf16>
    %87 = vector.shape_cast %86 : vector<1x4x4xbf16> to vector<4x4xbf16>
    %cst_54 = arith.constant dense<0.000000e+00> : vector<64x4xf32>
    %88 = tpu.matmul %85, %87, %cst_54 {dimension_numbers = #tpu.dot_dimension_numbers<[1], [0], [0], [1], [0, 0, 1, 1], [], []>} : vector<64x4xbf16>, vector<4x4xbf16>, vector<64x4xf32> -> vector<64x4xf32>
    %89 = arith.addf %82, %88 : vector<64x4xf32>
    %90 = vector.extract_strided_slice %12 {offsets = [1, 0, 0], sizes = [8, 8, 4], strides = [1, 1, 1]} : vector<9x16x4xf32> to vector<8x8x4xf32>
    %91 = vector.shape_cast %90 : vector<8x8x4xf32> to vector<64x4xf32>
    %92 = arith.truncf %91 : vector<64x4xf32> to vector<64x4xbf16>
    %c6 = arith.constant 6 : index
    %c0_55 = arith.constant 0 : index
    %c0_56 = arith.constant 0 : index
    %93 = vector.load %arg8[%c6, %c0_55, %c0_56] : memref<9x4x4xbf16, #tpu.memory_space<vmem>>, vector<1x4x4xbf16>
    %94 = vector.shape_cast %93 : vector<1x4x4xbf16> to vector<4x4xbf16>
    %cst_57 = arith.constant dense<0.000000e+00> : vector<64x4xf32>
    %95 = tpu.matmul %92, %94, %cst_57 {dimension_numbers = #tpu.dot_dimension_numbers<[1], [0], [0], [1], [0, 0, 1, 1], [], []>} : vector<64x4xbf16>, vector<4x4xbf16>, vector<64x4xf32> -> vector<64x4xf32>
    %96 = arith.addf %89, %95 : vector<64x4xf32>
    %97 = vector.extract_strided_slice %24 {offsets = [1, 0, 0], sizes = [8, 8, 4], strides = [1, 1, 1]} : vector<9x16x4xf32> to vector<8x8x4xf32>
    %98 = vector.shape_cast %97 : vector<8x8x4xf32> to vector<64x4xf32>
    %99 = arith.truncf %98 : vector<64x4xf32> to vector<64x4xbf16>
    %c7 = arith.constant 7 : index
    %c0_58 = arith.constant 0 : index
    %c0_59 = arith.constant 0 : index
    %100 = vector.load %arg8[%c7, %c0_58, %c0_59] : memref<9x4x4xbf16, #tpu.memory_space<vmem>>, vector<1x4x4xbf16>
    %101 = vector.shape_cast %100 : vector<1x4x4xbf16> to vector<4x4xbf16>
    %cst_60 = arith.constant dense<0.000000e+00> : vector<64x4xf32>
    %102 = tpu.matmul %99, %101, %cst_60 {dimension_numbers = #tpu.dot_dimension_numbers<[1], [0], [0], [1], [0, 0, 1, 1], [], []>} : vector<64x4xbf16>, vector<4x4xbf16>, vector<64x4xf32> -> vector<64x4xf32>
    %103 = arith.addf %96, %102 : vector<64x4xf32>
    %104 = vector.extract_strided_slice %12 {offsets = [1, 1, 0], sizes = [8, 8, 4], strides = [1, 1, 1]} : vector<9x16x4xf32> to vector<8x8x4xf32>
    %105 = vector.shape_cast %104 : vector<8x8x4xf32> to vector<64x4xf32>
    %106 = arith.truncf %105 : vector<64x4xf32> to vector<64x4xbf16>
    %c8 = arith.constant 8 : index
    %c0_61 = arith.constant 0 : index
    %c0_62 = arith.constant 0 : index
    %107 = vector.load %arg8[%c8, %c0_61, %c0_62] : memref<9x4x4xbf16, #tpu.memory_space<vmem>>, vector<1x4x4xbf16>
    %108 = vector.shape_cast %107 : vector<1x4x4xbf16> to vector<4x4xbf16>
    %cst_63 = arith.constant dense<0.000000e+00> : vector<64x4xf32>
    %109 = tpu.matmul %106, %108, %cst_63 {dimension_numbers = #tpu.dot_dimension_numbers<[1], [0], [0], [1], [0, 0, 1, 1], [], []>} : vector<64x4xbf16>, vector<4x4xbf16>, vector<64x4xf32> -> vector<64x4xf32>
    %110 = arith.addf %103, %109 : vector<64x4xf32>
    %c0_64 = arith.constant 0 : index
    %c0_65 = arith.constant 0 : index
    %111 = vector.load %arg9[%c0_64, %c0_65] : memref<2x4xf32, #tpu.memory_space<vmem>>, vector<1x4xf32>
    %112 = vector.broadcast %111 : vector<1x4xf32> to vector<64x4xf32>
    %113 = arith.mulf %110, %112 : vector<64x4xf32>
    %c1_66 = arith.constant 1 : index
    %c0_67 = arith.constant 0 : index
    %114 = vector.load %arg9[%c1_66, %c0_67] : memref<2x4xf32, #tpu.memory_space<vmem>>, vector<1x4xf32>
    %115 = vector.broadcast %114 : vector<1x4xf32> to vector<64x4xf32>
    %116 = arith.addf %113, %115 : vector<64x4xf32>
    %cst_68 = arith.constant 0.000000e+00 : f32
    %117 = vector.broadcast %cst_68 : f32 to vector<64x4xf32>
    %118 = arith.maximumf %116, %117 : vector<64x4xf32>
    %119 = arith.truncf %118 : vector<64x4xf32> to vector<64x4xbf16>
    %c0_69 = arith.constant 0 : index
    %c0_70 = arith.constant 0 : index
    %120 = vector.load %arg10[%c0_69, %c0_70] : memref<4x16xbf16, #tpu.memory_space<vmem>>, vector<4x16xbf16>
    %cst_71 = arith.constant dense<0.000000e+00> : vector<64x16xf32>
    %121 = tpu.matmul %119, %120, %cst_71 {dimension_numbers = #tpu.dot_dimension_numbers<[1], [0], [0], [1], [0, 0, 1, 1], [], []>} : vector<64x4xbf16>, vector<4x16xbf16>, vector<64x16xf32> -> vector<64x16xf32>
    %c0_72 = arith.constant 0 : index
    %c0_73 = arith.constant 0 : index
    %122 = vector.load %arg13[%c0_72, %c0_73] : memref<2x16xf32, #tpu.memory_space<vmem>>, vector<1x16xf32>
    %123 = vector.broadcast %122 : vector<1x16xf32> to vector<64x16xf32>
    %124 = arith.mulf %121, %123 : vector<64x16xf32>
    %c1_74 = arith.constant 1 : index
    %c0_75 = arith.constant 0 : index
    %125 = vector.load %arg13[%c1_74, %c0_75] : memref<2x16xf32, #tpu.memory_space<vmem>>, vector<1x16xf32>
    %126 = vector.broadcast %125 : vector<1x16xf32> to vector<64x16xf32>
    %127 = arith.addf %124, %126 : vector<64x16xf32>
    %c0_76 = arith.constant 0 : index
    %c0_77 = arith.constant 0 : index
    %c0_78 = arith.constant 0 : index
    %128 = vector.load %arg5[%c0_76, %c0_77, %c0_78] : memref<1x64x8xbf16, #tpu.memory_space<vmem>>, vector<1x64x8xbf16>
    %129 = vector.shape_cast %128 : vector<1x64x8xbf16> to vector<64x8xbf16>
    %c0_79 = arith.constant 0 : index
    %c0_80 = arith.constant 0 : index
    %130 = vector.load %arg11[%c0_79, %c0_80] : memref<8x16xbf16, #tpu.memory_space<vmem>>, vector<8x16xbf16>
    %cst_81 = arith.constant dense<0.000000e+00> : vector<64x16xf32>
    %131 = tpu.matmul %129, %130, %cst_81 {dimension_numbers = #tpu.dot_dimension_numbers<[1], [0], [0], [1], [0, 0, 1, 1], [], []>} : vector<64x8xbf16>, vector<8x16xbf16>, vector<64x16xf32> -> vector<64x16xf32>
    %c0_82 = arith.constant 0 : index
    %c0_83 = arith.constant 0 : index
    %132 = vector.load %arg12[%c0_82, %c0_83] : memref<2x16xf32, #tpu.memory_space<vmem>>, vector<1x16xf32>
    %133 = vector.broadcast %132 : vector<1x16xf32> to vector<64x16xf32>
    %134 = arith.mulf %131, %133 : vector<64x16xf32>
    %c1_84 = arith.constant 1 : index
    %c0_85 = arith.constant 0 : index
    %135 = vector.load %arg12[%c1_84, %c0_85] : memref<2x16xf32, #tpu.memory_space<vmem>>, vector<1x16xf32>
    %136 = vector.broadcast %135 : vector<1x16xf32> to vector<64x16xf32>
    %137 = arith.addf %134, %136 : vector<64x16xf32>
    %138 = arith.addf %127, %137 : vector<64x16xf32>
    %c0_86 = arith.constant 0 : index
    %c0_87 = arith.constant 0 : index
    %c0_88 = arith.constant 0 : index
    %139 = vector.load %arg15[%c0_86, %c0_87, %c0_88] : memref<1x64x16xf32, #tpu.memory_space<vmem>>, vector<1x64x16xf32>
    %140 = vector.shape_cast %139 : vector<1x64x16xf32> to vector<64x16xf32>
    %141 = vector.shape_cast %138 : vector<64x16xf32> to vector<1x64x16xf32>
    tpu.vector_store %arg15[%c0_86, %c0_87, %c0_88], %141 {strides = array<i32>} : memref<1x64x16xf32, #tpu.memory_space<vmem>>, vector<1x64x16xf32>,
    %cst_89 = arith.constant 0.000000e+00 : f32
    %142 = vector.broadcast %cst_89 : f32 to vector<64x16xf32>
    %143 = arith.maximumf %138, %142 : vector<64x16xf32>
    %144 = arith.truncf %143 : vector<64x16xf32> to vector<64x16xbf16>
    %c0_90 = arith.constant 0 : index
    %c0_91 = arith.constant 0 : index
    %c0_92 = arith.constant 0 : index
    %145 = vector.load %arg14[%c0_90, %c0_91, %c0_92] : memref<1x64x16xbf16, #tpu.memory_space<vmem>>, vector<1x64x16xbf16>
    %146 = vector.shape_cast %145 : vector<1x64x16xbf16> to vector<64x16xbf16>
    %147 = vector.shape_cast %144 : vector<64x16xbf16> to vector<1x64x16xbf16>
    tpu.vector_store %arg14[%c0_90, %c0_91, %c0_92], %147 {strides = array<i32>} : memref<1x64x16xbf16, #tpu.memory_space<vmem>>, vector<1x64x16xbf16>,
    return
  }
  func.func @transform_0(%arg0: i32) -> (i32, i32, i32) {
    %c0_i32 = arith.constant 0 : i32
    %c0_i32_0 = arith.constant 0 : i32
    %c0_i32_1 = arith.constant 0 : i32
    return %arg0, %c0_i32, %c0_i32_0 : i32, i32, i32
  }
  func.func @transform_1(%arg0: i32) -> (i32, i32, i32) {
    %c0_i32 = arith.constant 0 : i32
    %c0_i32_0 = arith.constant 0 : i32
    %c0_i32_1 = arith.constant 0 : i32
    return %arg0, %c0_i32, %c0_i32_0 : i32, i32, i32
  }
  func.func @transform_2(%arg0: i32) -> (i32, i32, i32) {
    %c0_i32 = arith.constant 0 : i32
    %c0_i32_0 = arith.constant 0 : i32
    %c0_i32_1 = arith.constant 0 : i32
    return %arg0, %c0_i32, %c0_i32_0 : i32, i32, i32
  }
  func.func @transform_3(%arg0: i32) -> (i32, i32, i32) {
    %c0_i32 = arith.constant 0 : i32
    %c0_i32_0 = arith.constant 0 : i32
    %c0_i32_1 = arith.constant 0 : i32
    return %arg0, %c0_i32, %c0_i32_0 : i32, i32, i32
  }
  func.func @transform_4(%arg0: i32) -> (i32, i32, i32) {
    %c0_i32 = arith.constant 0 : i32
    %c0_i32_0 = arith.constant 0 : i32
    %c0_i32_1 = arith.constant 0 : i32
    return %arg0, %c0_i32, %c0_i32_0 : i32, i32, i32
  }
  func.func @transform_5(%arg0: i32) -> (i32, i32) {
    %c0_i32 = arith.constant 0 : i32
    %c0_i32_0 = arith.constant 0 : i32
    %c0_i32_1 = arith.constant 0 : i32
    return %c0_i32, %c0_i32_0 : i32, i32
  }
  func.func @transform_6(%arg0: i32) -> (i32, i32) {
    %c0_i32 = arith.constant 0 : i32
    %c0_i32_0 = arith.constant 0 : i32
    %c0_i32_1 = arith.constant 0 : i32
    return %c0_i32, %c0_i32_0 : i32, i32
  }
  func.func @transform_7(%arg0: i32) -> (i32, i32, i32) {
    %c0_i32 = arith.constant 0 : i32
    %c0_i32_0 = arith.constant 0 : i32
    %c0_i32_1 = arith.constant 0 : i32
    %c0_i32_2 = arith.constant 0 : i32
    return %c0_i32, %c0_i32_0, %c0_i32_1 : i32, i32, i32
  }
  func.func @transform_8(%arg0: i32) -> (i32, i32) {
    %c0_i32 = arith.constant 0 : i32
    %c0_i32_0 = arith.constant 0 : i32
    %c0_i32_1 = arith.constant 0 : i32
    return %c0_i32, %c0_i32_0 : i32, i32
  }
  func.func @transform_9(%arg0: i32) -> (i32, i32) {
    %c0_i32 = arith.constant 0 : i32
    %c0_i32_0 = arith.constant 0 : i32
    %c0_i32_1 = arith.constant 0 : i32
    return %c0_i32, %c0_i32_0 : i32, i32
  }
  func.func @transform_10(%arg0: i32) -> (i32, i32) {
    %c0_i32 = arith.constant 0 : i32
    %c0_i32_0 = arith.constant 0 : i32
    %c0_i32_1 = arith.constant 0 : i32
    return %c0_i32, %c0_i32_0 : i32, i32
  }
  func.func @transform_11(%arg0: i32) -> (i32, i32) {
    %c0_i32 = arith.constant 0 : i32
    %c0_i32_0 = arith.constant 0 : i32
    %c0_i32_1 = arith.constant 0 : i32
    return %c0_i32, %c0_i32_0 : i32, i32
  }
  func.func @transform_12(%arg0: i32) -> (i32, i32) {
    %c0_i32 = arith.constant 0 : i32
    %c0_i32_0 = arith.constant 0 : i32
    %c0_i32_1 = arith.constant 0 : i32
    return %c0_i32, %c0_i32_0 : i32, i32
  }
  func.func @transform_13(%arg0: i32) -> (i32, i32, i32) {
    %c0_i32 = arith.constant 0 : i32
    %c0_i32_0 = arith.constant 0 : i32
    %c0_i32_1 = arith.constant 0 : i32
    return %arg0, %c0_i32, %c0_i32_0 : i32, i32, i32
  }
  func.func @transform_14(%arg0: i32) -> (i32, i32, i32) {
    %c0_i32 = arith.constant 0 : i32
    %c0_i32_0 = arith.constant 0 : i32
    %c0_i32_1 = arith.constant 0 : i32
    return %arg0, %c0_i32, %c0_i32_0 : i32, i32, i32
  }
}

</mosaic_0001>

<llo_original>
// kernel: bottleneck_forward.1
$region0: #{bottleneck_forward.1}
  #allocation0 [shape = 'u32[]', space=smem, size = 0x4, offset = 0x4, fixed_abs, tag = 'smem constant byte address 0x4 - core index']
  #allocation1 [shape = 'u32[144,128]{1,0:T(1,128)}', space=vmem, size = 0x12000, scoped, tag = 'internal scratch']
  %s0 = inlined_call_operand.vmem [shape: bf16[2,144,8], index: 0, kind: input, shape index: {}]
  %s1 = inlined_call_operand.vmem [shape: bf16[2,144,8], index: 1, kind: input, shape index: {}]
  %s2 = inlined_call_operand.vmem [shape: bf16[2,144,8], index: 2, kind: input, shape index: {}]
  %s3 = inlined_call_operand.vmem [shape: bf16[2,144,8], index: 3, kind: input, shape index: {}]
  %s4 = inlined_call_operand.vmem [shape: bf16[2,64,8], index: 4, kind: input, shape index: {}]
  %s5 = inlined_call_operand.vmem [shape: bf16[8,4], index: 5, kind: input, shape index: {}]
  %s6 = inlined_call_operand.vmem [shape: f32[2,4], index: 6, kind: input, shape index: {}]
  %s7 = inlined_call_operand.vmem [shape: bf16[9,4,4], index: 7, kind: input, shape index: {}]
  %s8 = inlined_call_operand.vmem [shape: f32[2,4], index: 8, kind: input, shape index: {}]
  %s9 = inlined_call_operand.vmem [shape: bf16[4,16], index: 9, kind: input, shape index: {}]
  %s10 = inlined_call_operand.vmem [shape: bf16[8,16], index: 10, kind: input, shape index: {}]
  %s11 = inlined_call_operand.vmem [shape: f32[2,16], index: 11, kind: input, shape index: {}]
  %s12 = inlined_call_operand.vmem [shape: f32[2,16], index: 12, kind: input, shape index: {}]
  %s13 = inlined_call_operand.hbm [shape: bf16[2,64,16], index: 13, kind: output, shape index: {0}]
  %s14 = inlined_call_operand.hbm [shape: f32[2,64,16], index: 14, kind: output, shape index: {1}]
  %15 = xla_tuple %s13, %s14
  %s16 = sld [smem:[#allocation0]]
  $region93: #{bottleneck_forward.1} parent=0
    _
  %s18 = ssub.s32 1, %s16
  %s19 = scalar_select 0, %s18, %s16
  $region1: #{bottleneck_forward.1} parent=0
    #allocation2 [shape = 'u8[32768]{0}', space=vmem, size = 0x8000, scoped, tag = 'output window, operand 0']
    #allocation3 [shape = 's32[2]{0}', space=sflag, size = 0x8, scoped, tag = 'scoped memory for bottleneck_forward.1']
    #allocation4 [shape = 'u8[65536]{0}', space=vmem, size = 0x10000, scoped, tag = 'output window, operand 1']
    #allocation5 [shape = 's32[2]{0}', space=sflag, size = 0x8, scoped, tag = 'scoped memory for bottleneck_forward.1']
    %20 = vsyncpa [#allocation3], 0
    %s21 = scalar_lea.sflag [#allocation3], 1
    %22 = vsyncpa %s21, 0
    %23 = vsyncpa [#allocation5], 0
    %s24 = scalar_lea.sflag [#allocation5], 1
    %25 = vsyncpa %s24, 0
    loop: start=0, step=1, limit=4
    $region2: #{bottleneck_forward.1} parent=1 // loop_pre_header
      _
    $region3: #{bottleneck_forward.1} parent=1 // loop_header
      %s27 = sphi 0, %s31
      %p28 = scmp.ge.s32.totalorder %s27, 4
      %s37 = sphi 0, %s39
      %s40 = sphi 0, %s37
      %s41 = sphi 0, %s40
      %s57 = sphi 0, %s41
      %s63 = sphi 0, %s65
      %s66 = sphi 0, %s63
      %s67 = sphi 0, %s66
      %s83 = sphi 0, %s67
      %s89 = sphi 0, %s91
      %s92 = sphi 0, %s89
      %s93 = sphi 0, %s92
      %s109 = sphi 0, %s93
      %s115 = sphi 0, %s117
      %s118 = sphi 0, %s115
      %s119 = sphi 0, %s118
      %s135 = sphi 0, %s119
      %s141 = sphi 0, %s143
      %s144 = sphi 0, %s141
      %s145 = sphi 0, %s144
      %s161 = sphi 0, %s145
      %s165 = sphi 0, %s165
      %s167 = sphi 0, %s165
      %s168 = sphi 0, %s167
      %s182 = sphi 0, %s168
      %s186 = sphi 0, %s186
      %s188 = sphi 0, %s186
      %s189 = sphi 0, %s188
      %s203 = sphi 0, %s189
      %s207 = sphi 0, %s207
      %s209 = sphi 0, %s207
      %s210 = sphi 0, %s209
      %s224 = sphi 0, %s210
      %s228 = sphi 0, %s228
      %s230 = sphi 0, %s228
      %s231 = sphi 0, %s230
      %s245 = sphi 0, %s231
      %s249 = sphi 0, %s249
      %s251 = sphi 0, %s249
      %s252 = sphi 0, %s251
      %s266 = sphi 0, %s252
      %s270 = sphi 0, %s270
      %s272 = sphi 0, %s270
      %s273 = sphi 0, %s272
      %s287 = sphi 0, %s273
      %s291 = sphi 0, %s291
      %s293 = sphi 0, %s291
      %s294 = sphi 0, %s293
      %s308 = sphi 0, %s294
      %s312 = sphi 0, %s312
      %s314 = sphi 0, %s312
      %s315 = sphi 0, %s314
      %s329 = sphi 0, %s315
      %s335 = sphi 0, %s337
      %s338 = sphi 0, %s335
      %s339 = sphi 0, %s338
      %s355 = sphi 0, %s339
      %s361 = sphi 0, %s363
      %s364 = sphi 0, %s361
      %s365 = sphi 0, %s364
      %s381 = sphi 0, %s365
    $region4: #{bottleneck_forward.1} parent=1 // loop_header_branch
      %30 = sbr.rel (%p28) target = $region8
    $region5: #{bottleneck_forward.1} parent=1 // loop_body
      %s32 = ssub.s32 %s27, 1
      %s33 = ssub.s32 %s27, 2
      %s34 = sadd.s32 %s27, 1
      %s35 = ssub.s32 %s27, %s34
      %p36 = scmp.eq.s32.totalorder %s35, 0
      %s38 = sadd.s32 %s37, 1
      %s39 = scalar_select %p36, %s37, %s38
      %p42 = pneg %p36
      %p43 = scmp.eq.s32.totalorder %s27, 1
      %p44 = por %p42, %p43
      %p45 = scmp.ne.s32.totalorder %s37, %s40
      %p46 = scmp.eq.s32.totalorder %s27, 0
      %p47 = por %p45, %p46
      %p48 = scmp.ne.s32.totalorder %s37, %s40
      %p49 = scmp.eq.s32.totalorder %s32, 1
      %p50 = por %p48, %p49
      %p51 = scmp.ne.s32.totalorder %s40, %s41
      %p52 = scmp.eq.s32.totalorder %s32, 0
      %p53 = por %p51, %p52
      %p54 = scmp.ne.s32.totalorder %s40, %s41
      %p55 = scmp.eq.s32.totalorder %s33, 1
      %p56 = por %p54, %p55
      %p58 = scmp.ne.s32.totalorder %s41, %s57
      %p59 = scmp.eq.s32.totalorder %s33, 0
      %p60 = por %p58, %p59
      %s61 = ssub.s32 %s27, %s34
      %p62 = scmp.eq.s32.totalorder %s61, 0
      %s64 = sadd.s32 %s63, 1
      %s65 = scalar_select %p62, %s63, %s64
      %p68 = pneg %p62
      %p69 = scmp.eq.s32.totalorder %s27, 1
      %p70 = por %p68, %p69
      %p71 = scmp.ne.s32.totalorder %s63, %s66
      %p72 = scmp.eq.s32.totalorder %s27, 0
      %p73 = por %p71, %p72
      %p74 = scmp.ne.s32.totalorder %s63, %s66
      %p75 = scmp.eq.s32.totalorder %s32, 1
      %p76 = por %p74, %p75
      %p77 = scmp.ne.s32.totalorder %s66, %s67
      %p78 = scmp.eq.s32.totalorder %s32, 0
      %p79 = por %p77, %p78
      %p80 = scmp.ne.s32.totalorder %s66, %s67
      %p81 = scmp.eq.s32.totalorder %s33, 1
      %p82 = por %p80, %p81
      %p84 = scmp.ne.s32.totalorder %s67, %s83
      %p85 = scmp.eq.s32.totalorder %s33, 0
      %p86 = por %p84, %p85
      %s87 = ssub.s32 %s27, %s34
      %p88 = scmp.eq.s32.totalorder %s87, 0
      %s90 = sadd.s32 %s89, 1
      %s91 = scalar_select %p88, %s89, %s90
      %p94 = pneg %p88
      %p95 = scmp.eq.s32.totalorder %s27, 1
      %p96 = por %p94, %p95
      %p97 = scmp.ne.s32.totalorder %s89, %s92
      %p98 = scmp.eq.s32.totalorder %s27, 0
      %p99 = por %p97, %p98
      %p100 = scmp.ne.s32.totalorder %s89, %s92
      %p101 = scmp.eq.s32.totalorder %s32, 1
      %p102 = por %p100, %p101
      %p103 = scmp.ne.s32.totalorder %s92, %s93
      %p104 = scmp.eq.s32.totalorder %s32, 0
      %p105 = por %p103, %p104
      %p106 = scmp.ne.s32.totalorder %s92, %s93
      %p107 = scmp.eq.s32.totalorder %s33, 1
      %p108 = por %p106, %p107
      %p110 = scmp.ne.s32.totalorder %s93, %s109
      %p111 = scmp.eq.s32.totalorder %s33, 0
      %p112 = por %p110, %p111
      %s113 = ssub.s32 %s27, %s34
      %p114 = scmp.eq.s32.totalorder %s113, 0
      %s116 = sadd.s32 %s115, 1
      %s117 = scalar_select %p114, %s115, %s116
      %p120 = pneg %p114
      %p121 = scmp.eq.s32.totalorder %s27, 1
      %p122 = por %p120, %p121
      %p123 = scmp.ne.s32.totalorder %s115, %s118
      %p124 = scmp.eq.s32.totalorder %s27, 0
      %p125 = por %p123, %p124
      %p126 = scmp.ne.s32.totalorder %s115, %s118
      %p127 = scmp.eq.s32.totalorder %s32, 1
      %p128 = por %p126, %p127
      %p129 = scmp.ne.s32.totalorder %s118, %s119
      %p130 = scmp.eq.s32.totalorder %s32, 0
      %p131 = por %p129, %p130
      %p132 = scmp.ne.s32.totalorder %s118, %s119
      %p133 = scmp.eq.s32.totalorder %s33, 1
      %p134 = por %p132, %p133
      %p136 = scmp.ne.s32.totalorder %s119, %s135
      %p137 = scmp.eq.s32.totalorder %s33, 0
      %p138 = por %p136, %p137
      %s139 = ssub.s32 %s27, %s34
      %p140 = scmp.eq.s32.totalorder %s139, 0
      %s142 = sadd.s32 %s141, 1
      %s143 = scalar_select %p140, %s141, %s142
      %p146 = pneg %p140
      %p147 = scmp.eq.s32.totalorder %s27, 1
      %p148 = por %p146, %p147
      %p149 = scmp.ne.s32.totalorder %s141, %s144
      %p150 = scmp.eq.s32.totalorder %s27, 0
      %p151 = por %p149, %p150
      %p152 = scmp.ne.s32.totalorder %s141, %s144
      %p153 = scmp.eq.s32.totalorder %s32, 1
      %p154 = por %p152, %p153
      %p155 = scmp.ne.s32.totalorder %s144, %s145
      %p156 = scmp.eq.s32.totalorder %s32, 0
      %p157 = por %p155, %p156
      %p158 = scmp.ne.s32.totalorder %s144, %s145
      %p159 = scmp.eq.s32.totalorder %s33, 1
      %p160 = por %p158, %p159
      %p162 = scmp.ne.s32.totalorder %s145, %s161
      %p163 = scmp.eq.s32.totalorder %s33, 0
      %p164 = por %p162, %p163
      %s166 = sadd.s32 %s165, 1
      %p169 = scmp.eq.s32.totalorder %s27, 1
      %p170 = scmp.ne.s32.totalorder %s165, %s167
      %p171 = scmp.eq.s32.totalorder %s27, 0
      %p172 = por %p170, %p171
      %p173 = scmp.ne.s32.totalorder %s165, %s167
      %p174 = scmp.eq.s32.totalorder %s32, 1
      %p175 = por %p173, %p174
      %p176 = scmp.ne.s32.totalorder %s167, %s168
      %p177 = scmp.eq.s32.totalorder %s32, 0
      %p178 = por %p176, %p177
      %p179 = scmp.ne.s32.totalorder %s167, %s168
      %p180 = scmp.eq.s32.totalorder %s33, 1
      %p181 = por %p179, %p180
      %p183 = scmp.ne.s32.totalorder %s168, %s182
      %p184 = scmp.eq.s32.totalorder %s33, 0
      %p185 = por %p183, %p184
      %s187 = sadd.s32 %s186, 1
      %p190 = scmp.eq.s32.totalorder %s27, 1
      %p191 = scmp.ne.s32.totalorder %s186, %s188
      %p192 = scmp.eq.s32.totalorder %s27, 0
      %p193 = por %p191, %p192
      %p194 = scmp.ne.s32.totalorder %s186, %s188
      %p195 = scmp.eq.s32.totalorder %s32, 1
      %p196 = por %p194, %p195
      %p197 = scmp.ne.s32.totalorder %s188, %s189
      %p198 = scmp.eq.s32.totalorder %s32, 0
      %p199 = por %p197, %p198
      %p200 = scmp.ne.s32.totalorder %s188, %s189
      %p201 = scmp.eq.s32.totalorder %s33, 1
      %p202 = por %p200, %p201
      %p204 = scmp.ne.s32.totalorder %s189, %s203
      %p205 = scmp.eq.s32.totalorder %s33, 0
      %p206 = por %p204, %p205
      %s208 = sadd.s32 %s207, 1
      %p211 = scmp.eq.s32.totalorder %s27, 1
      %p212 = scmp.ne.s32.totalorder %s207, %s209
      %p213 = scmp.eq.s32.totalorder %s27, 0
      %p214 = por %p212, %p213
      %p215 = scmp.ne.s32.totalorder %s207, %s209
      %p216 = scmp.eq.s32.totalorder %s32, 1
      %p217 = por %p215, %p216
      %p218 = scmp.ne.s32.totalorder %s209, %s210
      %p219 = scmp.eq.s32.totalorder %s32, 0
      %p220 = por %p218, %p219
      %p221 = scmp.ne.s32.totalorder %s209, %s210
      %p222 = scmp.eq.s32.totalorder %s33, 1
      %p223 = por %p221, %p222
      %p225 = scmp.ne.s32.totalorder %s210, %s224
      %p226 = scmp.eq.s32.totalorder %s33, 0
      %p227 = por %p225, %p226
      %s229 = sadd.s32 %s228, 1
      %p232 = scmp.eq.s32.totalorder %s27, 1
      %p233 = scmp.ne.s32.totalorder %s228, %s230
      %p234 = scmp.eq.s32.totalorder %s27, 0
      %p235 = por %p233, %p234
      %p236 = scmp.ne.s32.totalorder %s228, %s230
      %p237 = scmp.eq.s32.totalorder %s32, 1
      %p238 = por %p236, %p237
      %p239 = scmp.ne.s32.totalorder %s230, %s231
      %p240 = scmp.eq.s32.totalorder %s32, 0
      %p241 = por %p239, %p240
      %p242 = scmp.ne.s32.totalorder %s230, %s231
      %p243 = scmp.eq.s32.totalorder %s33, 1
      %p244 = por %p242, %p243
      %p246 = scmp.ne.s32.totalorder %s231, %s245
      %p247 = scmp.eq.s32.totalorder %s33, 0
      %p248 = por %p246, %p247
      %s250 = sadd.s32 %s249, 1
      %p253 = scmp.eq.s32.totalorder %s27, 1
      %p254 = scmp.ne.s32.totalorder %s249, %s251
      %p255 = scmp.eq.s32.totalorder %s27, 0
      %p256 = por %p254, %p255
      %p257 = scmp.ne.s32.totalorder %s249, %s251
      %p258 = scmp.eq.s32.totalorder %s32, 1
      %p259 = por %p257, %p258
      %p260 = scmp.ne.s32.totalorder %s251, %s252
      %p261 = scmp.eq.s32.totalorder %s32, 0
      %p262 = por %p260, %p261
      %p263 = scmp.ne.s32.totalorder %s251, %s252
      %p264 = scmp.eq.s32.totalorder %s33, 1
      %p265 = por %p263, %p264
      %p267 = scmp.ne.s32.totalorder %s252, %s266
      %p268 = scmp.eq.s32.totalorder %s33, 0
      %p269 = por %p267, %p268
      %s271 = sadd.s32 %s270, 1
      %p274 = scmp.eq.s32.totalorder %s27, 1
      %p275 = scmp.ne.s32.totalorder %s270, %s272
      %p276 = scmp.eq.s32.totalorder %s27, 0
      %p277 = por %p275, %p276
      %p278 = scmp.ne.s32.totalorder %s270, %s272
      %p279 = scmp.eq.s32.totalorder %s32, 1
      %p280 = por %p278, %p279
      %p281 = scmp.ne.s32.totalorder %s272, %s273
      %p282 = scmp.eq.s32.totalorder %s32, 0
      %p283 = por %p281, %p282
      %p284 = scmp.ne.s32.totalorder %s272, %s273
      %p285 = scmp.eq.s32.totalorder %s33, 1
      %p286 = por %p284, %p285
      %p288 = scmp.ne.s32.totalorder %s273, %s287
      %p289 = scmp.eq.s32.totalorder %s33, 0
      %p290 = por %p288, %p289
      %s292 = sadd.s32 %s291, 1
      %p295 = scmp.eq.s32.totalorder %s27, 1
      %p296 = scmp.ne.s32.totalorder %s291, %s293
      %p297 = scmp.eq.s32.totalorder %s27, 0
      %p298 = por %p296, %p297
      %p299 = scmp.ne.s32.totalorder %s291, %s293
      %p300 = scmp.eq.s32.totalorder %s32, 1
      %p301 = por %p299, %p300
      %p302 = scmp.ne.s32.totalorder %s293, %s294
      %p303 = scmp.eq.s32.totalorder %s32, 0
      %p304 = por %p302, %p303
      %p305 = scmp.ne.s32.totalorder %s293, %s294
      %p306 = scmp.eq.s32.totalorder %s33, 1
      %p307 = por %p305, %p306
      %p309 = scmp.ne.s32.totalorder %s294, %s308
      %p310 = scmp.eq.s32.totalorder %s33, 0
      %p311 = por %p309, %p310
      %s313 = sadd.s32 %s312, 1
      %p316 = scmp.eq.s32.totalorder %s27, 1
      %p317 = scmp.ne.s32.totalorder %s312, %s314
      %p318 = scmp.eq.s32.totalorder %s27, 0
      %p319 = por %p317, %p318
      %p320 = scmp.ne.s32.totalorder %s312, %s314
      %p321 = scmp.eq.s32.totalorder %s32, 1
      %p322 = por %p320, %p321
      %p323 = scmp.ne.s32.totalorder %s314, %s315
      %p324 = scmp.eq.s32.totalorder %s32, 0
      %p325 = por %p323, %p324
      %p326 = scmp.ne.s32.totalorder %s314, %s315
      %p327 = scmp.eq.s32.totalorder %s33, 1
      %p328 = por %p326, %p327
      %p330 = scmp.ne.s32.totalorder %s315, %s329
      %p331 = scmp.eq.s32.totalorder %s33, 0
      %p332 = por %p330, %p331
      %s333 = ssub.s32 %s27, %s34
      %p334 = scmp.eq.s32.totalorder %s333, 0
      %s336 = sadd.s32 %s335, 1
      %s337 = scalar_select %p334, %s335, %s336
      %p340 = pneg %p334
      %p341 = scmp.eq.s32.totalorder %s27, 1
      %p342 = por %p340, %p341
      %p343 = scmp.ne.s32.totalorder %s335, %s338
      %p344 = scmp.eq.s32.totalorder %s27, 0
      %p345 = por %p343, %p344
      %p346 = scmp.ne.s32.totalorder %s335, %s338
      %p347 = scmp.eq.s32.totalorder %s32, 1
      %p348 = por %p346, %p347
      %p349 = scmp.ne.s32.totalorder %s338, %s339
      %p350 = scmp.eq.s32.totalorder %s32, 0
      %p351 = por %p349, %p350
      %p352 = scmp.ne.s32.totalorder %s338, %s339
      %p353 = scmp.eq.s32.totalorder %s33, 1
      %p354 = por %p352, %p353
      %p356 = scmp.ne.s32.totalorder %s339, %s355
      %p357 = scmp.eq.s32.totalorder %s33, 0
      %p358 = por %p356, %p357
      %s359 = ssub.s32 %s27, %s34
      %p360 = scmp.eq.s32.totalorder %s359, 0
      %s362 = sadd.s32 %s361, 1
      %s363 = scalar_select %p360, %s361, %s362
      %p366 = pneg %p360
      %p367 = scmp.eq.s32.totalorder %s27, 1
      %p368 = por %p366, %p367
      %p369 = scmp.ne.s32.totalorder %s361, %s364
      %p370 = scmp.eq.s32.totalorder %s27, 0
      %p371 = por %p369, %p370
      %p372 = scmp.ne.s32.totalorder %s361, %s364
      %p373 = scmp.eq.s32.totalorder %s32, 1
      %p374 = por %p372, %p373
      %p375 = scmp.ne.s32.totalorder %s364, %s365
      %p376 = scmp.eq.s32.totalorder %s32, 0
      %p377 = por %p375, %p376
      %p378 = scmp.ne.s32.totalorder %s364, %s365
      %p379 = scmp.eq.s32.totalorder %s33, 1
      %p380 = por %p378, %p379
      %p382 = scmp.ne.s32.totalorder %s365, %s381
      %p383 = scmp.eq.s32.totalorder %s33, 0
      %p384 = por %p382, %p383
      %p385 = scmp.le.s32.totalorder 1, %s27
      %p386 = scmp.lt.s32.totalorder %s27, 3
      %p387 = pnand %p385, %p386
      %p388 = pneg %p387
      // Predicated region
      $region9: #{bottleneck_forward.1} parent=5 // pred_check
        _
      $region10: #{bottleneck_forward.1} parent=5 // pred_check_branch
        %390 = sbr.rel (%p387) target = $region12
      $region11: #{bottleneck_forward.1} parent=5 // pred_region
        %s391 = ssub.s32 %s27, 1
        // Predicated region
        $region13: #{bottleneck_forward.1} parent=11 // pred_check
          %p392 = pneg %p178
        $region14: #{bottleneck_forward.1} parent=11 // pred_check_branch
          %394 = sbr.rel (%p392) target = $region16
        $region15: #{bottleneck_forward.1} parent=11 // pred_region
          _
        $region16: #{bottleneck_forward.1} parent=11 // pred_fallthru
          _
        // Predicated region
        $region17: #{bottleneck_forward.1} parent=11 // pred_check
          %p395 = pneg %p199
        $region18: #{bottleneck_forward.1} parent=11 // pred_check_branch
          %397 = sbr.rel (%p395) target = $region20
        $region19: #{bottleneck_forward.1} parent=11 // pred_region
          _
        $region20: #{bottleneck_forward.1} parent=11 // pred_fallthru
          _
        // Predicated region
        $region21: #{bottleneck_forward.1} parent=11 // pred_check
          %p398 = pneg %p220
        $region22: #{bottleneck_forward.1} parent=11 // pred_check_branch
          %400 = sbr.rel (%p398) target = $region24
        $region23: #{bottleneck_forward.1} parent=11 // pred_region
          _
        $region24: #{bottleneck_forward.1} parent=11 // pred_fallthru
          _
        // Predicated region
        $region25: #{bottleneck_forward.1} parent=11 // pred_check
          %p401 = pneg %p241
        $region26: #{bottleneck_forward.1} parent=11 // pred_check_branch
          %403 = sbr.rel (%p401) target = $region28
        $region27: #{bottleneck_forward.1} parent=11 // pred_region
          _
        $region28: #{bottleneck_forward.1} parent=11 // pred_fallthru
          _
        // Predicated region
        $region29: #{bottleneck_forward.1} parent=11 // pred_check
          %p404 = pneg %p262
        $region30: #{bottleneck_forward.1} parent=11 // pred_check_branch
          %406 = sbr.rel (%p404) target = $region32
        $region31: #{bottleneck_forward.1} parent=11 // pred_region
          _
        $region32: #{bottleneck_forward.1} parent=11 // pred_fallthru
          _
        // Predicated region
        $region33: #{bottleneck_forward.1} parent=11 // pred_check
          %p407 = pneg %p283
        $region34: #{bottleneck_forward.1} parent=11 // pred_check_branch
          %409 = sbr.rel (%p407) target = $region36
        $region35: #{bottleneck_forward.1} parent=11 // pred_region
          _
        $region36: #{bottleneck_forward.1} parent=11 // pred_fallthru
          _
        // Predicated region
        $region37: #{bottleneck_forward.1} parent=11 // pred_check
          %p410 = pneg %p304
        $region38: #{bottleneck_forward.1} parent=11 // pred_check_branch
          %412 = sbr.rel (%p410) target = $region40
        $region39: #{bottleneck_forward.1} parent=11 // pred_region
          _
        $region40: #{bottleneck_forward.1} parent=11 // pred_fallthru
          _
        // Predicated region
        $region41: #{bottleneck_forward.1} parent=11 // pred_check
          %p413 = pneg %p325
        $region42: #{bottleneck_forward.1} parent=11 // pred_check_branch
          %415 = sbr.rel (%p413) target = $region44
        $region43: #{bottleneck_forward.1} parent=11 // pred_region
          _
        $region44: #{bottleneck_forward.1} parent=11 // pred_fallthru
          _
      $region12: #{bottleneck_forward.1} parent=5 // pred_fallthru
        _
      %p416 = scmp.lt.s32.totalorder %s27, 2
      // Predicated region
      $region45: #{bottleneck_forward.1} parent=5 // pred_check
        %p417 = pneg %p416
      $region46: #{bottleneck_forward.1} parent=5 // pred_check_branch
        %419 = sbr.rel (%p417) target = $region48
      $region47: #{bottleneck_forward.1} parent=5 // pred_region
        // Predicated region
        $region49: #{bottleneck_forward.1} parent=47 // pred_check
          %p420 = pneg %p47
        $region50: #{bottleneck_forward.1} parent=47 // pred_check_branch
          %422 = sbr.rel (%p420) target = $region52
        $region51: #{bottleneck_forward.1} parent=47 // pred_region
          %p423 = scmp.lt.s32.totalorder %s27, 1
          %s424 = scalar_select %p423, %s27, 1
          %s425 = smul.addr %s424, 18
          %s426 = smul.addr %s425, 4
          %s427 = scalar_lea.vmem %s0, %s426
        $region52: #{bottleneck_forward.1} parent=47 // pred_fallthru
          _
        // Predicated region
        $region53: #{bottleneck_forward.1} parent=47 // pred_check
          %p428 = pneg %p73
        $region54: #{bottleneck_forward.1} parent=47 // pred_check_branch
          %430 = sbr.rel (%p428) target = $region56
        $region55: #{bottleneck_forward.1} parent=47 // pred_region
          %p431 = scmp.lt.s32.totalorder %s27, 1
          %s432 = scalar_select %p431, %s27, 1
          %s433 = smul.addr %s432, 18
          %s434 = smul.addr %s433, 4
          %s435 = scalar_lea.vmem %s1, %s434
        $region56: #{bottleneck_forward.1} parent=47 // pred_fallthru
          _
        // Predicated region
        $region57: #{bottleneck_forward.1} parent=47 // pred_check
          %p436 = pneg %p99
        $region58: #{bottleneck_forward.1} parent=47 // pred_check_branch
          %438 = sbr.rel (%p436) target = $region60
        $region59: #{bottleneck_forward.1} parent=47 // pred_region
          %p439 = scmp.lt.s32.totalorder %s27, 1
          %s440 = scalar_select %p439, %s27, 1
          %s441 = smul.addr %s440, 18
          %s442 = smul.addr %s441, 4
          %s443 = scalar_lea.vmem %s2, %s442
        $region60: #{bottleneck_forward.1} parent=47 // pred_fallthru
          _
        // Predicated region
        $region61: #{bottleneck_forward.1} parent=47 // pred_check
          %p444 = pneg %p125
        $region62: #{bottleneck_forward.1} parent=47 // pred_check_branch
          %446 = sbr.rel (%p444) target = $region64
        $region63: #{bottleneck_forward.1} parent=47 // pred_region
          %p447 = scmp.lt.s32.totalorder %s27, 1
          %s448 = scalar_select %p447, %s27, 1
          %s449 = smul.addr %s448, 18
          %s450 = smul.addr %s449, 4
          %s451 = scalar_lea.vmem %s3, %s450
        $region64: #{bottleneck_forward.1} parent=47 // pred_fallthru
          _
        // Predicated region
        $region65: #{bottleneck_forward.1} parent=47 // pred_check
          %p452 = pneg %p151
        $region66: #{bottleneck_forward.1} parent=47 // pred_check_branch
          %454 = sbr.rel (%p452) target = $region68
        $region67: #{bottleneck_forward.1} parent=47 // pred_region
          %p455 = scmp.lt.s32.totalorder %s27, 1
          %s456 = scalar_select %p455, %s27, 1
          %s457 = smul.addr %s456, 8
          %s458 = smul.addr %s457, 4
          %s459 = scalar_lea.vmem %s4, %s458
        $region68: #{bottleneck_forward.1} parent=47 // pred_fallthru
          _
      $region48: #{bottleneck_forward.1} parent=5 // pred_fallthru
        _
      %p460 = scmp.le.s32.totalorder 1, %s27
      %p461 = scmp.lt.s32.totalorder %s27, 3
      %p462 = pnand %p460, %p461
      %p463 = pneg %p462
      // Predicated region
      $region69: #{bottleneck_forward.1} parent=5 // pred_check
        _
      $region70: #{bottleneck_forward.1} parent=5 // pred_check_branch
        %465 = sbr.rel (%p462) target = $region72
      $region71: #{bottleneck_forward.1} parent=5 // pred_region
        %s466 = ssub.s32 %s27, 1
        %p467 = scmp.lt.s32.totalorder %s32, 1
        %s468 = scalar_select %p467, %s32, 1
        %s469 = smul.addr %s468, 18
        %s470 = smul.addr %s469, 4
        %s471 = scalar_lea.vmem %s0, %s470
        %p472 = pneg %p53
        %p473 = pneg %p50
        %p474 = scmp.lt.s32.totalorder %s32, 1
        %s475 = scalar_select %p474, %s32, 1
        %s476 = smul.addr %s475, 18
        %s477 = smul.addr %s476, 4
        %s478 = scalar_lea.vmem %s1, %s477
        %p479 = pneg %p79
        %p480 = pneg %p76
        %p481 = scmp.lt.s32.totalorder %s32, 1
        %s482 = scalar_select %p481, %s32, 1
        %s483 = smul.addr %s482, 18
        %s484 = smul.addr %s483, 4
        %s485 = scalar_lea.vmem %s2, %s484
        %p486 = pneg %p105
        %p487 = pneg %p102
        %p488 = scmp.lt.s32.totalorder %s32, 1
        %s489 = scalar_select %p488, %s32, 1
        %s490 = smul.addr %s489, 18
        %s491 = smul.addr %s490, 4
        %s492 = scalar_lea.vmem %s3, %s491
        %p493 = pneg %p131
        %p494 = pneg %p128
        %p495 = scmp.lt.s32.totalorder %s32, 1
        %s496 = scalar_select %p495, %s32, 1
        %s497 = smul.addr %s496, 8
        %s498 = smul.addr %s497, 4
        %s499 = scalar_lea.vmem %s4, %s498
        %p500 = pneg %p157
        %p501 = pneg %p154
        %p502 = pneg %p178
        %p503 = pneg %p175
        %p504 = pneg %p199
        %p505 = pneg %p196
        %p506 = pneg %p220
        %p507 = pneg %p217
        %p508 = pneg %p241
        %p509 = pneg %p238
        %p510 = pneg %p262
        %p511 = pneg %p259
        %p512 = pneg %p283
        %p513 = pneg %p280
        %p514 = pneg %p304
        %p515 = pneg %p301
        %p516 = pneg %p325
        %p517 = pneg %p322
        %p518 = pneg %p351
        %p519 = pneg %p348
        %s520 = sand.u32 %s338, 1
        %s521 = scalar_lea.sflag [#allocation3], %s520
        %s522 = sand.u32 %s338, 1
        %s523 = smul.addr %s522, 32
        %s524 = scalar_lea.vmem [#allocation2], %s523
        %p525 = pneg %p377
        %p526 = pneg %p374
        %s527 = sand.u32 %s364, 1
        %s528 = scalar_lea.sflag [#allocation5], %s527
        %s529 = sand.u32 %s364, 1
        %s530 = smul.addr %s529, 64
        %s531 = scalar_lea.vmem [#allocation4], %s530
        %p532 = scmp.lt.s32.totalorder %s32, 1
        %s533 = scalar_select %p532, %s32, 1
        %s534 = smul.addr %s533, 18
        %s535 = smul.addr %s534, 4
        %s536 = scalar_lea.vmem %s0, %s535
        %p537 = scmp.lt.s32.totalorder %s32, 1
        %s538 = scalar_select %p537, %s32, 1
        %s539 = smul.addr %s538, 18
        %s540 = smul.addr %s539, 4
        %s541 = scalar_lea.vmem %s1, %s540
        %p542 = scmp.lt.s32.totalorder %s32, 1
        %s543 = scalar_select %p542, %s32, 1
        %s544 = smul.addr %s543, 18
        %s545 = smul.addr %s544, 4
        %s546 = scalar_lea.vmem %s2, %s545
        %p547 = scmp.lt.s32.totalorder %s32, 1
        %s548 = scalar_select %p547, %s32, 1
        %s549 = smul.addr %s548, 18
        %s550 = smul.addr %s549, 4
        %s551 = scalar_lea.vmem %s3, %s550
        %p552 = scmp.lt.s32.totalorder %s32, 1
        %s553 = scalar_select %p552, %s32, 1
        %s554 = smul.addr %s553, 8
        %s555 = smul.addr %s554, 4
        %s556 = scalar_lea.vmem %s4, %s555
        %v558 = vld [vmem:[%s5] sm:$0xf]
        %v559 = vld [vmem:[%s536] sm:$0xf]
        %v560 = vld [vmem:[%s536 + $0x4] sm:$0xf]
        %v561 = vld [vmem:[%s536 + $0x8] sm:$0xf]
        %v562 = vld [vmem:[%s536 + $0xc] sm:$0xf]
        %v563 = vld [vmem:[%s536 + $0x10] sm:$0xf]
        %v564 = vld [vmem:[%s536 + $0x14] sm:$0xf]
        %v565 = vld [vmem:[%s536 + $0x18] sm:$0xf]
        %v566 = vld [vmem:[%s536 + $0x1c] sm:$0xf]
        %v567 = vld [vmem:[%s536 + $0x20] sm:$0xf]
        %v568 = vld [vmem:[%s536 + $0x24] sm:$0xf]
        %v569 = vld [vmem:[%s536 + $0x28] sm:$0xf]
        %v570 = vld [vmem:[%s536 + $0x2c] sm:$0xf]
        %v571 = vld [vmem:[%s536 + $0x30] sm:$0xf]
        %v572 = vld [vmem:[%s536 + $0x34] sm:$0xf]
        %v573 = vld [vmem:[%s536 + $0x38] sm:$0xf]
        %v574 = vld [vmem:[%s536 + $0x3c] sm:$0xf]
        %v575 = vld [vmem:[%s536 + $0x40] sm:$0xf]
        %v576 = vld [vmem:[%s536 + $0x44] sm:$0xf]
        %v595 = vunpack.c.l.b16 %v559
        %v596 = vunpack.c.l.b16 %v560
        %v597 = vunpack.c.l.b16 %v561
        %v598 = vunpack.c.l.b16 %v562
        %v599 = vunpack.c.l.b16 %v563
        %v600 = vunpack.c.l.b16 %v564
        %v601 = vunpack.c.l.b16 %v565
        %v602 = vunpack.c.l.b16 %v566
        %v603 = vunpack.c.l.b16 %v567
        %v604 = vunpack.c.l.b16 %v568
        %v605 = vunpack.c.l.b16 %v569
        %v606 = vunpack.c.l.b16 %v570
        %v607 = vunpack.c.l.b16 %v571
        %v608 = vunpack.c.l.b16 %v572
        %v609 = vunpack.c.l.b16 %v573
        %v610 = vunpack.c.l.b16 %v574
        %v611 = vunpack.c.l.b16 %v575
        %v612 = vunpack.c.l.b16 %v576
        %v613 = vpack.c.b16 %v596, %v595
        %v614 = vpack.c.b16 %v598, %v597
        %v615 = vpack.c.b16 %v600, %v599
        %v616 = vpack.c.b16 %v602, %v601
        %v617 = vpack.c.b16 %v604, %v603
        %v618 = vpack.c.b16 %v606, %v605
        %v619 = vpack.c.b16 %v608, %v607
        %v620 = vpack.c.b16 %v610, %v609
        %v621 = vpack.c.b16 %v612, %v611
        %vm622 = vcmask 64512
        %v624 = vsel %vm622, %v613, 0
        %v627 = vsel %vm622, %v614, 0
        %v630 = vsel %vm622, %v615, 0
        %v633 = vsel %vm622, %v616, 0
        %v636 = vsel %vm622, %v617, 0
        %v639 = vsel %vm622, %v618, 0
        %v642 = vsel %vm622, %v619, 0
        %v645 = vsel %vm622, %v620, 0
        %v648 = vsel %vm622, %v621, 0
        %vm650 = vcmask 1043456
        %v652 = vsel %vm650, %v558, 0
        %654 = vmatprep.subr.bf16.mxu0 0
        %655 = vmatpush1.bf16.msra.mxu0 0
        %656 = vmatprep.subr.bf16.mxu0 0
        %657 = vmatpush1.bf16.msra.mxu0 0
        %658 = vmatprep.subr.bf16.mxu0 0
        %659 = vmatpush1.bf16.msra.mxu0 0
        %660 = vmatprep.subr.bf16.mxu0 0
        %661 = vmatpush1.bf16.msra.mxu0 0
        %662 = vmatprep.subr.bf16.mxu0 0
        %663 = vmatpush1.bf16.msra.mxu0 0
        %664 = vmatprep.subr.bf16.mxu0 0
        %665 = vmatpush1.bf16.msra.mxu0 0
        %666 = vmatprep.subr.bf16.mxu0 0
        %667 = vmatpush1.bf16.msra.mxu0 0
        %668 = vmatprep.subr.bf16.mxu0 0
        %669 = vmatpush1.bf16.msra.mxu0 %v652
        %670 = vmatprep.subr.bf16.mxu0 0
        %671 = vmatpush2.bf16.msra.mxu0 0
        %672 = vmatprep.subr.bf16.mxu0 0
        %673 = vmatpush2.bf16.msra.mxu0 0
        %674 = vmatprep.subr.bf16.mxu0 0
        %675 = vmatpush2.bf16.msra.mxu0 0
        %676 = vmatprep.subr.bf16.mxu0 0
        %677 = vmatpush2.bf16.msra.mxu0 0
        %678 = vmatprep.subr.bf16.mxu0 0
        %679 = vmatpush2.bf16.msra.mxu0 0
        %680 = vmatprep.subr.bf16.mxu0 0
        %681 = vmatpush2.bf16.msra.mxu0 0
        %682 = vmatprep.subr.bf16.mxu0 0
        %683 = vmatpush2.bf16.msra.mxu0 0
        %684 = vmatprep.subr.bf16.mxu0 0
        %685 = vmatpush2.bf16.msra.mxu0 0
        %686 = vmatprep.mubr.bf16.mxu0 0
        %687 = vmatmul.mubr.bf16.gmra.mxu0 %v624
        %v688 = vpop.f32.mrf.mxu0
        %v689 = vadd.f32 0.0, %v688
        %v690 = vpop.f32.mrf.mxu0
        %v691 = vpop.f32.mrf.mxu0
        %v692 = vadd.f32 0.0, %v691
        %v693 = vpop.f32.mrf.mxu0
        %694 = vmatprep.mubr.bf16.mxu0 0
        %695 = vmatmul.mubr.bf16.gmra.mxu0 %v627
        %v696 = vpop.f32.mrf.mxu0
        %v697 = vadd.f32 0.0, %v696
        %v698 = vpop.f32.mrf.mxu0
        %v699 = vpop.f32.mrf.mxu0
        %v700 = vadd.f32 0.0, %v699
        %v701 = vpop.f32.mrf.mxu0
        %702 = vmatprep.mubr.bf16.mxu0 0
        %703 = vmatmul.mubr.bf16.gmra.mxu0 %v630
        %v704 = vpop.f32.mrf.mxu0
        %v705 = vadd.f32 0.0, %v704
        %v706 = vpop.f32.mrf.mxu0
        %v707 = vpop.f32.mrf.mxu0
        %v708 = vadd.f32 0.0, %v707
        %v709 = vpop.f32.mrf.mxu0
        %710 = vmatprep.mubr.bf16.mxu0 0
        %711 = vmatmul.mubr.bf16.gmra.mxu0 %v633
        %v712 = vpop.f32.mrf.mxu0
        %v713 = vadd.f32 0.0, %v712
        %v714 = vpop.f32.mrf.mxu0
        %v715 = vpop.f32.mrf.mxu0
        %v716 = vadd.f32 0.0, %v715
        %v717 = vpop.f32.mrf.mxu0
        %718 = vmatprep.mubr.bf16.mxu0 0
        %719 = vmatmul.mubr.bf16.gmra.mxu0 %v636
        %v720 = vpop.f32.mrf.mxu0
        %v721 = vadd.f32 0.0, %v720
        %v722 = vpop.f32.mrf.mxu0
        %v723 = vpop.f32.mrf.mxu0
        %v724 = vadd.f32 0.0, %v723
        %v725 = vpop.f32.mrf.mxu0
        %726 = vmatprep.mubr.bf16.mxu0 0
        %727 = vmatmul.mubr.bf16.gmra.mxu0 %v639
        %v728 = vpop.f32.mrf.mxu0
        %v729 = vadd.f32 0.0, %v728
        %v730 = vpop.f32.mrf.mxu0
        %v731 = vpop.f32.mrf.mxu0
        %v732 = vadd.f32 0.0, %v731
        %v733 = vpop.f32.mrf.mxu0
        %734 = vmatprep.mubr.bf16.mxu0 0
        %735 = vmatmul.mubr.bf16.gmra.mxu0 %v642
        %v736 = vpop.f32.mrf.mxu0
        %v737 = vadd.f32 0.0, %v736
        %v738 = vpop.f32.mrf.mxu0
        %v739 = vpop.f32.mrf.mxu0
        %v740 = vadd.f32 0.0, %v739
        %v741 = vpop.f32.mrf.mxu0
        %742 = vmatprep.mubr.bf16.mxu0 0
        %743 = vmatmul.mubr.bf16.gmra.mxu0 %v645
        %v744 = vpop.f32.mrf.mxu0
        %v745 = vadd.f32 0.0, %v744
        %v746 = vpop.f32.mrf.mxu0
        %v747 = vpop.f32.mrf.mxu0
        %v748 = vadd.f32 0.0, %v747
        %v749 = vpop.f32.mrf.mxu0
        %750 = vmatprep.mubr.bf16.mxu0 0
        %751 = vmatmul.mubr.bf16.gmra.mxu0 %v648
        %v752 = vpop.f32.mrf.mxu0
        %v753 = vadd.f32 0.0, %v752
        %v754 = vpop.f32.mrf.mxu0
        %v755 = vpop.f32.mrf.mxu0
        %v756 = vadd.f32 0.0, %v755
        %v757 = vpop.f32.mrf.mxu0
        %758 = vdwg.mxu0
        %v759 = vld [vmem:[%s6] sm:$0x1]
        %v760 = vlaneseq
        %v761 = vshrl.u32 %v760, 7
        %v762 = vsub.s32 0, %v761
        %v763 = vrot.slane %v759, %v762
        %v764 = vmul.f32 %v689, %v763
        %v765 = vmul.f32 %v692, %v763
        %v766 = vmul.f32 %v697, %v763
        %v767 = vmul.f32 %v700, %v763
        %v768 = vmul.f32 %v705, %v763
        %v769 = vmul.f32 %v708, %v763
        %v770 = vmul.f32 %v713, %v763
        %v771 = vmul.f32 %v716, %v763
        %v772 = vmul.f32 %v721, %v763
        %v773 = vmul.f32 %v724, %v763
        %v774 = vmul.f32 %v729, %v763
        %v775 = vmul.f32 %v732, %v763
        %v776 = vmul.f32 %v737, %v763
        %v777 = vmul.f32 %v740, %v763
        %v778 = vmul.f32 %v745, %v763
        %v779 = vmul.f32 %v748, %v763
        %v780 = vmul.f32 %v753, %v763
        %v781 = vmul.f32 %v756, %v763
        %v782 = vld [vmem:[%s6 + $0x1] sm:$0x1]
        %v783 = vlaneseq
        %v784 = vshrl.u32 %v783, 7
        %v785 = vsub.s32 0, %v784
        %v786 = vrot.slane %v782, %v785
        %v787 = vadd.f32 %v764, %v786
        %v788 = vadd.f32 %v765, %v786
        %v789 = vadd.f32 %v766, %v786
        %v790 = vadd.f32 %v767, %v786
        %v791 = vadd.f32 %v768, %v786
        %v792 = vadd.f32 %v769, %v786
        %v793 = vadd.f32 %v770, %v786
        %v794 = vadd.f32 %v771, %v786
        %v795 = vadd.f32 %v772, %v786
        %v796 = vadd.f32 %v773, %v786
        %v797 = vadd.f32 %v774, %v786
        %v798 = vadd.f32 %v775, %v786
        %v799 = vadd.f32 %v776, %v786
        %v800 = vadd.f32 %v777, %v786
        %v801 = vadd.f32 %v778, %v786
        %v802 = vadd.f32 %v779, %v786
        %v803 = vadd.f32 %v780, %v786
        %v804 = vadd.f32 %v781, %v786
        %v805 = vmax.f32 %v787, 0.0
        %v806 = vmax.f32 %v788, 0.0
        %v807 = vmax.f32 %v789, 0.0
        %v808 = vmax.f32 %v790, 0.0
        %v809 = vmax.f32 %v791, 0.0
        %v810 = vmax.f32 %v792, 0.0
        %v811 = vmax.f32 %v793, 0.0
        %v812 = vmax.f32 %v794, 0.0
        %v813 = vmax.f32 %v795, 0.0
        %v814 = vmax.f32 %v796, 0.0
        %v815 = vmax.f32 %v797, 0.0
        %v816 = vmax.f32 %v798, 0.0
        %v817 = vmax.f32 %v799, 0.0
        %v818 = vmax.f32 %v800, 0.0
        %v819 = vmax.f32 %v801, 0.0
        %v820 = vmax.f32 %v802, 0.0
        %v821 = vmax.f32 %v803, 0.0
        %v822 = vmax.f32 %v804, 0.0
        %v823 = vld [vmem:[%s541] sm:$0xf]
        %v824 = vld [vmem:[%s541 + $0x4] sm:$0xf]
        %v825 = vld [vmem:[%s541 + $0x8] sm:$0xf]
        %v826 = vld [vmem:[%s541 + $0xc] sm:$0xf]
        %v827 = vld [vmem:[%s541 + $0x10] sm:$0xf]
        %v828 = vld [vmem:[%s541 + $0x14] sm:$0xf]
        %v829 = vld [vmem:[%s541 + $0x18] sm:$0xf]
        %v830 = vld [vmem:[%s541 + $0x1c] sm:$0xf]
        %v831 = vld [vmem:[%s541 + $0x20] sm:$0xf]
        %v832 = vld [vmem:[%s541 + $0x24] sm:$0xf]
        %v833 = vld [vmem:[%s541 + $0x28] sm:$0xf]
        %v834 = vld [vmem:[%s541 + $0x2c] sm:$0xf]
        %v835 = vld [vmem:[%s541 + $0x30] sm:$0xf]
        %v836 = vld [vmem:[%s541 + $0x34] sm:$0xf]
        %v837 = vld [vmem:[%s541 + $0x38] sm:$0xf]
        %v838 = vld [vmem:[%s541 + $0x3c] sm:$0xf]
        %v839 = vld [vmem:[%s541 + $0x40] sm:$0xf]
        %v840 = vld [vmem:[%s541 + $0x44] sm:$0xf]
        %v859 = vunpack.c.l.b16 %v823
        %v860 = vunpack.c.l.b16 %v824
        %v861 = vunpack.c.l.b16 %v825
        %v862 = vunpack.c.l.b16 %v826
        %v863 = vunpack.c.l.b16 %v827
        %v864 = vunpack.c.l.b16 %v828
        %v865 = vunpack.c.l.b16 %v829
        %v866 = vunpack.c.l.b16 %v830
        %v867 = vunpack.c.l.b16 %v831
        %v868 = vunpack.c.l.b16 %v832
        %v869 = vunpack.c.l.b16 %v833
        %v870 = vunpack.c.l.b16 %v834
        %v871 = vunpack.c.l.b16 %v835
        %v872 = vunpack.c.l.b16 %v836
        %v873 = vunpack.c.l.b16 %v837
        %v874 = vunpack.c.l.b16 %v838
        %v875 = vunpack.c.l.b16 %v839
        %v876 = vunpack.c.l.b16 %v840
        %v877 = vpack.c.b16 %v860, %v859
        %v878 = vpack.c.b16 %v862, %v861
        %v879 = vpack.c.b16 %v864, %v863
        %v880 = vpack.c.b16 %v866, %v865
        %v881 = vpack.c.b16 %v868, %v867
        %v882 = vpack.c.b16 %v870, %v869
        %v883 = vpack.c.b16 %v872, %v871
        %v884 = vpack.c.b16 %v874, %v873
        %v885 = vpack.c.b16 %v876, %v875
        %v887 = vsel %vm622, %v877, 0
        %v890 = vsel %vm622, %v878, 0
        %v893 = vsel %vm622, %v879, 0
        %v896 = vsel %vm622, %v880, 0
        %v899 = vsel %vm622, %v881, 0
        %v902 = vsel %vm622, %v882, 0
        %v905 = vsel %vm622, %v883, 0
        %v908 = vsel %vm622, %v884, 0
        %v911 = vsel %vm622, %v885, 0
        %913 = vmatprep.subr.bf16.mxu0 0
        %914 = vmatpush1.bf16.msra.mxu0 0
        %915 = vmatprep.subr.bf16.mxu0 0
        %916 = vmatpush1.bf16.msra.mxu0 0
        %917 = vmatprep.subr.bf16.mxu0 0
        %918 = vmatpush1.bf16.msra.mxu0 0
        %919 = vmatprep.subr.bf16.mxu0 0
        %920 = vmatpush1.bf16.msra.mxu0 0
        %921 = vmatprep.subr.bf16.mxu0 0
        %922 = vmatpush1.bf16.msra.mxu0 0
        %923 = vmatprep.subr.bf16.mxu0 0
        %924 = vmatpush1.bf16.msra.mxu0 0
        %925 = vmatprep.subr.bf16.mxu0 0
        %926 = vmatpush1.bf16.msra.mxu0 0
        %927 = vmatprep.subr.bf16.mxu0 0
        %928 = vmatpush1.bf16.msra.mxu0 %v652
        %929 = vmatprep.subr.bf16.mxu0 0
        %930 = vmatpush2.bf16.msra.mxu0 0
        %931 = vmatprep.subr.bf16.mxu0 0
        %932 = vmatpush2.bf16.msra.mxu0 0
        %933 = vmatprep.subr.bf16.mxu0 0
        %934 = vmatpush2.bf16.msra.mxu0 0
        %935 = vmatprep.subr.bf16.mxu0 0
        %936 = vmatpush2.bf16.msra.mxu0 0
        %937 = vmatprep.subr.bf16.mxu0 0
        %938 = vmatpush2.bf16.msra.mxu0 0
        %939 = vmatprep.subr.bf16.mxu0 0
        %940 = vmatpush2.bf16.msra.mxu0 0
        %941 = vmatprep.subr.bf16.mxu0 0
        %942 = vmatpush2.bf16.msra.mxu0 0
        %943 = vmatprep.subr.bf16.mxu0 0
        %944 = vmatpush2.bf16.msra.mxu0 0
        %945 = vmatprep.mubr.bf16.mxu0 0
        %946 = vmatmul.mubr.bf16.gmra.mxu0 %v887
        %v947 = vpop.f32.mrf.mxu0
        %v948 = vadd.f32 0.0, %v947
        %v949 = vpop.f32.mrf.mxu0
        %v950 = vpop.f32.mrf.mxu0
        %v951 = vpop.f32.mrf.mxu0
        %952 = vmatprep.mubr.bf16.mxu0 0
        %953 = vmatmul.mubr.bf16.gmra.mxu0 %v890
        %v954 = vpop.f32.mrf.mxu0
        %v955 = vadd.f32 0.0, %v954
        %v956 = vpop.f32.mrf.mxu0
        %v957 = vpop.f32.mrf.mxu0
        %v958 = vpop.f32.mrf.mxu0
        %959 = vmatprep.mubr.bf16.mxu0 0
        %960 = vmatmul.mubr.bf16.gmra.mxu0 %v893
        %v961 = vpop.f32.mrf.mxu0
        %v962 = vadd.f32 0.0, %v961
        %v963 = vpop.f32.mrf.mxu0
        %v964 = vpop.f32.mrf.mxu0
        %v965 = vpop.f32.mrf.mxu0
        %966 = vmatprep.mubr.bf16.mxu0 0
        %967 = vmatmul.mubr.bf16.gmra.mxu0 %v896
        %v968 = vpop.f32.mrf.mxu0
        %v969 = vadd.f32 0.0, %v968
        %v970 = vpop.f32.mrf.mxu0
        %v971 = vpop.f32.mrf.mxu0
        %v972 = vpop.f32.mrf.mxu0
        %973 = vmatprep.mubr.bf16.mxu0 0
        %974 = vmatmul.mubr.bf16.gmra.mxu0 %v899
        %v975 = vpop.f32.mrf.mxu0
        %v976 = vadd.f32 0.0, %v975
        %v977 = vpop.f32.mrf.mxu0
        %v978 = vpop.f32.mrf.mxu0
        %v979 = vpop.f32.mrf.mxu0
        %980 = vmatprep.mubr.bf16.mxu0 0
        %981 = vmatmul.mubr.bf16.gmra.mxu0 %v902
        %v982 = vpop.f32.mrf.mxu0
        %v983 = vadd.f32 0.0, %v982
        %v984 = vpop.f32.mrf.mxu0
        %v985 = vpop.f32.mrf.mxu0
        %v986 = vpop.f32.mrf.mxu0
        %987 = vmatprep.mubr.bf16.mxu0 0
        %988 = vmatmul.mubr.bf16.gmra.mxu0 %v905
        %v989 = vpop.f32.mrf.mxu0
        %v990 = vadd.f32 0.0, %v989
        %v991 = vpop.f32.mrf.mxu0
        %v992 = vpop.f32.mrf.mxu0
        %v993 = vpop.f32.mrf.mxu0
        %994 = vmatprep.mubr.bf16.mxu0 0
        %995 = vmatmul.mubr.bf16.gmra.mxu0 %v908
        %v996 = vpop.f32.mrf.mxu0
        %v997 = vadd.f32 0.0, %v996
        %v998 = vpop.f32.mrf.mxu0
        %v999 = vpop.f32.mrf.mxu0
        %v1000 = vpop.f32.mrf.mxu0
        %1001 = vmatprep.mubr.bf16.mxu0 0
        %1002 = vmatmul.mubr.bf16.gmra.mxu0 %v911
        %v1003 = vpop.f32.mrf.mxu0
        %v1004 = vadd.f32 0.0, %v1003
        %v1005 = vpop.f32.mrf.mxu0
        %v1006 = vpop.f32.mrf.mxu0
        %v1007 = vpop.f32.mrf.mxu0
        %1008 = vdwg.mxu0
        %v1009 = vmul.f32 %v948, %v763
        %v1010 = vmul.f32 %v955, %v763
        %v1011 = vmul.f32 %v962, %v763
        %v1012 = vmul.f32 %v969, %v763
        %v1013 = vmul.f32 %v976, %v763
        %v1014 = vmul.f32 %v983, %v763
        %v1015 = vmul.f32 %v990, %v763
        %v1016 = vmul.f32 %v997, %v763
        %v1017 = vmul.f32 %v1004, %v763
        %v1018 = vadd.f32 %v1009, %v786
        %v1019 = vadd.f32 %v1010, %v786
        %v1020 = vadd.f32 %v1011, %v786
        %v1021 = vadd.f32 %v1012, %v786
        %v1022 = vadd.f32 %v1013, %v786
        %v1023 = vadd.f32 %v1014, %v786
        %v1024 = vadd.f32 %v1015, %v786
        %v1025 = vadd.f32 %v1016, %v786
        %v1026 = vadd.f32 %v1017, %v786
        %v1027 = vmax.f32 %v1018, 0.0
        %v1028 = vmax.f32 %v1019, 0.0
        %v1029 = vmax.f32 %v1020, 0.0
        %v1030 = vmax.f32 %v1021, 0.0
        %v1031 = vmax.f32 %v1022, 0.0
        %v1032 = vmax.f32 %v1023, 0.0
        %v1033 = vmax.f32 %v1024, 0.0
        %v1034 = vmax.f32 %v1025, 0.0
        %v1035 = vmax.f32 %v1026, 0.0
        %v1036 = vld [vmem:[%s546] sm:$0xf]
        %v1037 = vld [vmem:[%s546 + $0x4] sm:$0xf]
        %v1038 = vld [vmem:[%s546 + $0x8] sm:$0xf]
        %v1039 = vld [vmem:[%s546 + $0xc] sm:$0xf]
        %v1040 = vld [vmem:[%s546 + $0x10] sm:$0xf]
        %v1041 = vld [vmem:[%s546 + $0x14] sm:$0xf]
        %v1042 = vld [vmem:[%s546 + $0x18] sm:$0xf]
        %v1043 = vld [vmem:[%s546 + $0x1c] sm:$0xf]
        %v1044 = vld [vmem:[%s546 + $0x20] sm:$0xf]
        %v1045 = vld [vmem:[%s546 + $0x24] sm:$0xf]
        %v1046 = vld [vmem:[%s546 + $0x28] sm:$0xf]
        %v1047 = vld [vmem:[%s546 + $0x2c] sm:$0xf]
        %v1048 = vld [vmem:[%s546 + $0x30] sm:$0xf]
        %v1049 = vld [vmem:[%s546 + $0x34] sm:$0xf]
        %v1050 = vld [vmem:[%s546 + $0x38] sm:$0xf]
        %v1051 = vld [vmem:[%s546 + $0x3c] sm:$0xf]
        %v1052 = vld [vmem:[%s546 + $0x40] sm:$0xf]
        %v1053 = vld [vmem:[%s546 + $0x44] sm:$0xf]
        %v1072 = vunpack.c.l.b16 %v1036
        %v1073 = vunpack.c.l.b16 %v1037
        %v1074 = vunpack.c.l.b16 %v1038
        %v1075 = vunpack.c.l.b16 %v1039
        %v1076 = vunpack.c.l.b16 %v1040
        %v1077 = vunpack.c.l.b16 %v1041
        %v1078 = vunpack.c.l.b16 %v1042
        %v1079 = vunpack.c.l.b16 %v1043
        %v1080 = vunpack.c.l.b16 %v1044
        %v1081 = vunpack.c.l.b16 %v1045
        %v1082 = vunpack.c.l.b16 %v1046
        %v1083 = vunpack.c.l.b16 %v1047
        %v1084 = vunpack.c.l.b16 %v1048
        %v1085 = vunpack.c.l.b16 %v1049
        %v1086 = vunpack.c.l.b16 %v1050
        %v1087 = vunpack.c.l.b16 %v1051
        %v1088 = vunpack.c.l.b16 %v1052
        %v1089 = vunpack.c.l.b16 %v1053
        %v1090 = vpack.c.b16 %v1073, %v1072
        %v1091 = vpack.c.b16 %v1075, %v1074
        %v1092 = vpack.c.b16 %v1077, %v1076
        %v1093 = vpack.c.b16 %v1079, %v1078
        %v1094 = vpack.c.b16 %v1081, %v1080
        %v1095 = vpack.c.b16 %v1083, %v1082
        %v1096 = vpack.c.b16 %v1085, %v1084
        %v1097 = vpack.c.b16 %v1087, %v1086
        %v1098 = vpack.c.b16 %v1089, %v1088
        %v1100 = vsel %vm622, %v1090, 0
        %v1103 = vsel %vm622, %v1091, 0
        %v1106 = vsel %vm622, %v1092, 0
        %v1109 = vsel %vm622, %v1093, 0
        %v1112 = vsel %vm622, %v1094, 0
        %v1115 = vsel %vm622, %v1095, 0
        %v1118 = vsel %vm622, %v1096, 0
        %v1121 = vsel %vm622, %v1097, 0
        %v1124 = vsel %vm622, %v1098, 0
        %1126 = vmatprep.subr.bf16.mxu0 0
        %1127 = vmatpush1.bf16.msra.mxu0 0
        %1128 = vmatprep.subr.bf16.mxu0 0
        %1129 = vmatpush1.bf16.msra.mxu0 0
        %1130 = vmatprep.subr.bf16.mxu0 0
        %1131 = vmatpush1.bf16.msra.mxu0 0
        %1132 = vmatprep.subr.bf16.mxu0 0
        %1133 = vmatpush1.bf16.msra.mxu0 0
        %1134 = vmatprep.subr.bf16.mxu0 0
        %1135 = vmatpush1.bf16.msra.mxu0 0
        %1136 = vmatprep.subr.bf16.mxu0 0
        %1137 = vmatpush1.bf16.msra.mxu0 0
        %1138 = vmatprep.subr.bf16.mxu0 0
        %1139 = vmatpush1.bf16.msra.mxu0 0
        %1140 = vmatprep.subr.bf16.mxu0 0
        %1141 = vmatpush1.bf16.msra.mxu0 %v652
        %1142 = vmatprep.subr.bf16.mxu0 0
        %1143 = vmatpush2.bf16.msra.mxu0 0
        %1144 = vmatprep.subr.bf16.mxu0 0
        %1145 = vmatpush2.bf16.msra.mxu0 0
        %1146 = vmatprep.subr.bf16.mxu0 0
        %1147 = vmatpush2.bf16.msra.mxu0 0
        %1148 = vmatprep.subr.bf16.mxu0 0
        %1149 = vmatpush2.bf16.msra.mxu0 0
        %1150 = vmatprep.subr.bf16.mxu0 0
        %1151 = vmatpush2.bf16.msra.mxu0 0
        %1152 = vmatprep.subr.bf16.mxu0 0
        %1153 = vmatpush2.bf16.msra.mxu0 0
        %1154 = vmatprep.subr.bf16.mxu0 0
        %1155 = vmatpush2.bf16.msra.mxu0 0
        %1156 = vmatprep.subr.bf16.mxu0 0
        %1157 = vmatpush2.bf16.msra.mxu0 0
        %1158 = vmatprep.mubr.bf16.mxu0 0
        %1159 = vmatmul.mubr.bf16.gmra.mxu0 %v1100
        %v1160 = vpop.f32.mrf.mxu0
        %v1161 = vadd.f32 0.0, %v1160
        %v1162 = vpop.f32.mrf.mxu0
        %v1163 = vpop.f32.mrf.mxu0
        %v1164 = vadd.f32 0.0, %v1163
        %v1165 = vpop.f32.mrf.mxu0
        %1166 = vmatprep.mubr.bf16.mxu0 0
        %1167 = vmatmul.mubr.bf16.gmra.mxu0 %v1103
        %v1168 = vpop.f32.mrf.mxu0
        %v1169 = vadd.f32 0.0, %v1168
        %v1170 = vpop.f32.mrf.mxu0
        %v1171 = vpop.f32.mrf.mxu0
        %v1172 = vadd.f32 0.0, %v1171
        %v1173 = vpop.f32.mrf.mxu0
        %1174 = vmatprep.mubr.bf16.mxu0 0
        %1175 = vmatmul.mubr.bf16.gmra.mxu0 %v1106
        %v1176 = vpop.f32.mrf.mxu0
        %v1177 = vadd.f32 0.0, %v1176
        %v1178 = vpop.f32.mrf.mxu0
        %v1179 = vpop.f32.mrf.mxu0
        %v1180 = vadd.f32 0.0, %v1179
        %v1181 = vpop.f32.mrf.mxu0
        %1182 = vmatprep.mubr.bf16.mxu0 0
        %1183 = vmatmul.mubr.bf16.gmra.mxu0 %v1109
        %v1184 = vpop.f32.mrf.mxu0
        %v1185 = vadd.f32 0.0, %v1184
        %v1186 = vpop.f32.mrf.mxu0
        %v1187 = vpop.f32.mrf.mxu0
        %v1188 = vadd.f32 0.0, %v1187
        %v1189 = vpop.f32.mrf.mxu0
        %1190 = vmatprep.mubr.bf16.mxu0 0
        %1191 = vmatmul.mubr.bf16.gmra.mxu0 %v1112
        %v1192 = vpop.f32.mrf.mxu0
        %v1193 = vadd.f32 0.0, %v1192
        %v1194 = vpop.f32.mrf.mxu0
        %v1195 = vpop.f32.mrf.mxu0
        %v1196 = vadd.f32 0.0, %v1195
        %v1197 = vpop.f32.mrf.mxu0
        %1198 = vmatprep.mubr.bf16.mxu0 0
        %1199 = vmatmul.mubr.bf16.gmra.mxu0 %v1115
        %v1200 = vpop.f32.mrf.mxu0
        %v1201 = vadd.f32 0.0, %v1200
        %v1202 = vpop.f32.mrf.mxu0
        %v1203 = vpop.f32.mrf.mxu0
        %v1204 = vadd.f32 0.0, %v1203
        %v1205 = vpop.f32.mrf.mxu0
        %1206 = vmatprep.mubr.bf16.mxu0 0
        %1207 = vmatmul.mubr.bf16.gmra.mxu0 %v1118
        %v1208 = vpop.f32.mrf.mxu0
        %v1209 = vadd.f32 0.0, %v1208
        %v1210 = vpop.f32.mrf.mxu0
        %v1211 = vpop.f32.mrf.mxu0
        %v1212 = vadd.f32 0.0, %v1211
        %v1213 = vpop.f32.mrf.mxu0
        %1214 = vmatprep.mubr.bf16.mxu0 0
        %1215 = vmatmul.mubr.bf16.gmra.mxu0 %v1121
        %v1216 = vpop.f32.mrf.mxu0
        %v1217 = vadd.f32 0.0, %v1216
        %v1218 = vpop.f32.mrf.mxu0
        %v1219 = vpop.f32.mrf.mxu0
        %v1220 = vadd.f32 0.0, %v1219
        %v1221 = vpop.f32.mrf.mxu0
        %1222 = vmatprep.mubr.bf16.mxu0 0
        %1223 = vmatmul.mubr.bf16.gmra.mxu0 %v1124
        %v1224 = vpop.f32.mrf.mxu0
        %v1225 = vpop.f32.mrf.mxu0
        %v1226 = vpop.f32.mrf.mxu0
        %v1227 = vpop.f32.mrf.mxu0
        %1228 = vdwg.mxu0
        %v1229 = vmul.f32 %v1161, %v763
        %v1230 = vmul.f32 %v1164, %v763
        %v1231 = vmul.f32 %v1169, %v763
        %v1232 = vmul.f32 %v1172, %v763
        %v1233 = vmul.f32 %v1177, %v763
        %v1234 = vmul.f32 %v1180, %v763
        %v1235 = vmul.f32 %v1185, %v763
        %v1236 = vmul.f32 %v1188, %v763
        %v1237 = vmul.f32 %v1193, %v763
        %v1238 = vmul.f32 %v1196, %v763
        %v1239 = vmul.f32 %v1201, %v763
        %v1240 = vmul.f32 %v1204, %v763
        %v1241 = vmul.f32 %v1209, %v763
        %v1242 = vmul.f32 %v1212, %v763
        %v1243 = vmul.f32 %v1217, %v763
        %v1244 = vmul.f32 %v1220, %v763
        %v1245 = vadd.f32 %v1229, %v786
        %v1246 = vadd.f32 %v1230, %v786
        %v1247 = vadd.f32 %v1231, %v786
        %v1248 = vadd.f32 %v1232, %v786
        %v1249 = vadd.f32 %v1233, %v786
        %v1250 = vadd.f32 %v1234, %v786
        %v1251 = vadd.f32 %v1235, %v786
        %v1252 = vadd.f32 %v1236, %v786
        %v1253 = vadd.f32 %v1237, %v786
        %v1254 = vadd.f32 %v1238, %v786
        %v1255 = vadd.f32 %v1239, %v786
        %v1256 = vadd.f32 %v1240, %v786
        %v1257 = vadd.f32 %v1241, %v786
        %v1258 = vadd.f32 %v1242, %v786
        %v1259 = vadd.f32 %v1243, %v786
        %v1260 = vadd.f32 %v1244, %v786
        %v1261 = vmax.f32 %v1245, 0.0
        %v1262 = vmax.f32 %v1246, 0.0
        %v1263 = vmax.f32 %v1247, 0.0
        %v1264 = vmax.f32 %v1248, 0.0
        %v1265 = vmax.f32 %v1249, 0.0
        %v1266 = vmax.f32 %v1250, 0.0
        %v1267 = vmax.f32 %v1251, 0.0
        %v1268 = vmax.f32 %v1252, 0.0
        %v1269 = vmax.f32 %v1253, 0.0
        %v1270 = vmax.f32 %v1254, 0.0
        %v1271 = vmax.f32 %v1255, 0.0
        %v1272 = vmax.f32 %v1256, 0.0
        %v1273 = vmax.f32 %v1257, 0.0
        %v1274 = vmax.f32 %v1258, 0.0
        %v1275 = vmax.f32 %v1259, 0.0
        %v1276 = vmax.f32 %v1260, 0.0
        %v1277 = vld [vmem:[%s551] sm:$0xf]
        %v1278 = vld [vmem:[%s551 + $0x4] sm:$0xf]
        %v1279 = vld [vmem:[%s551 + $0x8] sm:$0xf]
        %v1280 = vld [vmem:[%s551 + $0xc] sm:$0xf]
        %v1281 = vld [vmem:[%s551 + $0x10] sm:$0xf]
        %v1282 = vld [vmem:[%s551 + $0x14] sm:$0xf]
        %v1283 = vld [vmem:[%s551 + $0x18] sm:$0xf]
        %v1284 = vld [vmem:[%s551 + $0x1c] sm:$0xf]
        %v1285 = vld [vmem:[%s551 + $0x20] sm:$0xf]
        %v1286 = vld [vmem:[%s551 + $0x24] sm:$0xf]
        %v1287 = vld [vmem:[%s551 + $0x28] sm:$0xf]
        %v1288 = vld [vmem:[%s551 + $0x2c] sm:$0xf]
        %v1289 = vld [vmem:[%s551 + $0x30] sm:$0xf]
        %v1290 = vld [vmem:[%s551 + $0x34] sm:$0xf]
        %v1291 = vld [vmem:[%s551 + $0x38] sm:$0xf]
        %v1292 = vld [vmem:[%s551 + $0x3c] sm:$0xf]
        %v1293 = vld [vmem:[%s551 + $0x40] sm:$0xf]
        %v1294 = vld [vmem:[%s551 + $0x44] sm:$0xf]
        %v1313 = vunpack.c.l.b16 %v1277
        %v1314 = vunpack.c.l.b16 %v1278
        %v1315 = vunpack.c.l.b16 %v1279
        %v1316 = vunpack.c.l.b16 %v1280
        %v1317 = vunpack.c.l.b16 %v1281
        %v1318 = vunpack.c.l.b16 %v1282
        %v1319 = vunpack.c.l.b16 %v1283
        %v1320 = vunpack.c.l.b16 %v1284
        %v1321 = vunpack.c.l.b16 %v1285
        %v1322 = vunpack.c.l.b16 %v1286
        %v1323 = vunpack.c.l.b16 %v1287
        %v1324 = vunpack.c.l.b16 %v1288
        %v1325 = vunpack.c.l.b16 %v1289
        %v1326 = vunpack.c.l.b16 %v1290
        %v1327 = vunpack.c.l.b16 %v1291
        %v1328 = vunpack.c.l.b16 %v1292
        %v1329 = vunpack.c.l.b16 %v1293
        %v1330 = vunpack.c.l.b16 %v1294
        %v1331 = vpack.c.b16 %v1314, %v1313
        %v1332 = vpack.c.b16 %v1316, %v1315
        %v1333 = vpack.c.b16 %v1318, %v1317
        %v1334 = vpack.c.b16 %v1320, %v1319
        %v1335 = vpack.c.b16 %v1322, %v1321
        %v1336 = vpack.c.b16 %v1324, %v1323
        %v1337 = vpack.c.b16 %v1326, %v1325
        %v1338 = vpack.c.b16 %v1328, %v1327
        %v1339 = vpack.c.b16 %v1330, %v1329
        %v1341 = vsel %vm622, %v1331, 0
        %v1344 = vsel %vm622, %v1332, 0
        %v1347 = vsel %vm622, %v1333, 0
        %v1350 = vsel %vm622, %v1334, 0
        %v1353 = vsel %vm622, %v1335, 0
        %v1356 = vsel %vm622, %v1336, 0
        %v1359 = vsel %vm622, %v1337, 0
        %v1362 = vsel %vm622, %v1338, 0
        %v1365 = vsel %vm622, %v1339, 0
        %1367 = vmatprep.subr.bf16.mxu0 0
        %1368 = vmatpush1.bf16.msra.mxu0 0
        %1369 = vmatprep.subr.bf16.mxu0 0
        %1370 = vmatpush1.bf16.msra.mxu0 0
        %1371 = vmatprep.subr.bf16.mxu0 0
        %1372 = vmatpush1.bf16.msra.mxu0 0
        %1373 = vmatprep.subr.bf16.mxu0 0
        %1374 = vmatpush1.bf16.msra.mxu0 0
        %1375 = vmatprep.subr.bf16.mxu0 0
        %1376 = vmatpush1.bf16.msra.mxu0 0
        %1377 = vmatprep.subr.bf16.mxu0 0
        %1378 = vmatpush1.bf16.msra.mxu0 0
        %1379 = vmatprep.subr.bf16.mxu0 0
        %1380 = vmatpush1.bf16.msra.mxu0 0
        %1381 = vmatprep.subr.bf16.mxu0 0
        %1382 = vmatpush1.bf16.msra.mxu0 %v652
        %1383 = vmatprep.subr.bf16.mxu0 0
        %1384 = vmatpush2.bf16.msra.mxu0 0
        %1385 = vmatprep.subr.bf16.mxu0 0
        %1386 = vmatpush2.bf16.msra.mxu0 0
        %1387 = vmatprep.subr.bf16.mxu0 0
        %1388 = vmatpush2.bf16.msra.mxu0 0
        %1389 = vmatprep.subr.bf16.mxu0 0
        %1390 = vmatpush2.bf16.msra.mxu0 0
        %1391 = vmatprep.subr.bf16.mxu0 0
        %1392 = vmatpush2.bf16.msra.mxu0 0
        %1393 = vmatprep.subr.bf16.mxu0 0
        %1394 = vmatpush2.bf16.msra.mxu0 0
        %1395 = vmatprep.subr.bf16.mxu0 0
        %1396 = vmatpush2.bf16.msra.mxu0 0
        %1397 = vmatprep.subr.bf16.mxu0 0
        %1398 = vmatpush2.bf16.msra.mxu0 0
        %1399 = vmatprep.mubr.bf16.mxu0 0
        %1400 = vmatmul.mubr.bf16.gmra.mxu0 %v1341
        %v1401 = vpop.f32.mrf.mxu0
        %v1402 = vadd.f32 0.0, %v1401
        %v1403 = vpop.f32.mrf.mxu0
        %v1404 = vpop.f32.mrf.mxu0
        %v1405 = vpop.f32.mrf.mxu0
        %1406 = vmatprep.mubr.bf16.mxu0 0
        %1407 = vmatmul.mubr.bf16.gmra.mxu0 %v1344
        %v1408 = vpop.f32.mrf.mxu0
        %v1409 = vadd.f32 0.0, %v1408
        %v1410 = vpop.f32.mrf.mxu0
        %v1411 = vpop.f32.mrf.mxu0
        %v1412 = vpop.f32.mrf.mxu0
        %1413 = vmatprep.mubr.bf16.mxu0 0
        %1414 = vmatmul.mubr.bf16.gmra.mxu0 %v1347
        %v1415 = vpop.f32.mrf.mxu0
        %v1416 = vadd.f32 0.0, %v1415
        %v1417 = vpop.f32.mrf.mxu0
        %v1418 = vpop.f32.mrf.mxu0
        %v1419 = vpop.f32.mrf.mxu0
        %1420 = vmatprep.mubr.bf16.mxu0 0
        %1421 = vmatmul.mubr.bf16.gmra.mxu0 %v1350
        %v1422 = vpop.f32.mrf.mxu0
        %v1423 = vadd.f32 0.0, %v1422
        %v1424 = vpop.f32.mrf.mxu0
        %v1425 = vpop.f32.mrf.mxu0
        %v1426 = vpop.f32.mrf.mxu0
        %1427 = vmatprep.mubr.bf16.mxu0 0
        %1428 = vmatmul.mubr.bf16.gmra.mxu0 %v1353
        %v1429 = vpop.f32.mrf.mxu0
        %v1430 = vadd.f32 0.0, %v1429
        %v1431 = vpop.f32.mrf.mxu0
        %v1432 = vpop.f32.mrf.mxu0
        %v1433 = vpop.f32.mrf.mxu0
        %1434 = vmatprep.mubr.bf16.mxu0 0
        %1435 = vmatmul.mubr.bf16.gmra.mxu0 %v1356
        %v1436 = vpop.f32.mrf.mxu0
        %v1437 = vadd.f32 0.0, %v1436
        %v1438 = vpop.f32.mrf.mxu0
        %v1439 = vpop.f32.mrf.mxu0
        %v1440 = vpop.f32.mrf.mxu0
        %1441 = vmatprep.mubr.bf16.mxu0 0
        %1442 = vmatmul.mubr.bf16.gmra.mxu0 %v1359
        %v1443 = vpop.f32.mrf.mxu0
        %v1444 = vadd.f32 0.0, %v1443
        %v1445 = vpop.f32.mrf.mxu0
        %v1446 = vpop.f32.mrf.mxu0
        %v1447 = vpop.f32.mrf.mxu0
        %1448 = vmatprep.mubr.bf16.mxu0 0
        %1449 = vmatmul.mubr.bf16.gmra.mxu0 %v1362
        %v1450 = vpop.f32.mrf.mxu0
        %v1451 = vadd.f32 0.0, %v1450
        %v1452 = vpop.f32.mrf.mxu0
        %v1453 = vpop.f32.mrf.mxu0
        %v1454 = vpop.f32.mrf.mxu0
        %1455 = vmatprep.mubr.bf16.mxu0 0
        %1456 = vmatmul.mubr.bf16.gmra.mxu0 %v1365
        %v1457 = vpop.f32.mrf.mxu0
        %v1458 = vpop.f32.mrf.mxu0
        %v1459 = vpop.f32.mrf.mxu0
        %v1460 = vpop.f32.mrf.mxu0
        %1461 = vdwg.mxu0
        %v1462 = vmul.f32 %v1402, %v763
        %v1463 = vmul.f32 %v1409, %v763
        %v1464 = vmul.f32 %v1416, %v763
        %v1465 = vmul.f32 %v1423, %v763
        %v1466 = vmul.f32 %v1430, %v763
        %v1467 = vmul.f32 %v1437, %v763
        %v1468 = vmul.f32 %v1444, %v763
        %v1469 = vmul.f32 %v1451, %v763
        %v1470 = vadd.f32 %v1462, %v786
        %v1471 = vadd.f32 %v1463, %v786
        %v1472 = vadd.f32 %v1464, %v786
        %v1473 = vadd.f32 %v1465, %v786
        %v1474 = vadd.f32 %v1466, %v786
        %v1475 = vadd.f32 %v1467, %v786
        %v1476 = vadd.f32 %v1468, %v786
        %v1477 = vadd.f32 %v1469, %v786
        %v1478 = vmax.f32 %v1470, 0.0
        %v1479 = vmax.f32 %v1471, 0.0
        %v1480 = vmax.f32 %v1472, 0.0
        %v1481 = vmax.f32 %v1473, 0.0
        %v1482 = vmax.f32 %v1474, 0.0
        %v1483 = vmax.f32 %v1475, 0.0
        %v1484 = vmax.f32 %v1476, 0.0
        %v1485 = vmax.f32 %v1477, 0.0
        %v1486 = vpack.c.bf16 %v807, %v805
        %v1487 = vpack.c.bf16 %v811, %v809
        %v1488 = vpack.c.bf16 %v815, %v813
        %v1489 = vpack.c.bf16 %v819, %v817
        %v1490 = vld [vmem:[%s7] sm:$0x3]
        %v1491 = vpack.c.bf16 %v1028, %v1027
        %v1492 = vpack.c.bf16 %v1030, %v1029
        %v1493 = vpack.c.bf16 %v1032, %v1031
        %v1494 = vpack.c.bf16 %v1034, %v1033
        %s1495 = scalar_lea.vmem %s7, 2
        %v1496 = vld [vmem:[%s1495] sm:$0x3]
        %vm1497 = vcmask 31744
        %v1499 = vsel %vm1497, %v1491, 0
        %v1502 = vsel %vm1497, %v1492, 0
        %v1505 = vsel %vm1497, %v1493, 0
        %v1508 = vsel %vm1497, %v1494, 0
        %vm1510 = vcmask 1041408
        %v1512 = vsel %vm1510, %v1496, 0
        %1514 = vmatprep.subr.bf16.mxu0 0
        %1515 = vmatpush1.bf16.msra.mxu0 0
        %1516 = vmatprep.subr.bf16.mxu0 0
        %1517 = vmatpush1.bf16.msra.mxu0 0
        %1518 = vmatprep.subr.bf16.mxu0 0
        %1519 = vmatpush1.bf16.msra.mxu0 0
        %1520 = vmatprep.subr.bf16.mxu0 0
        %1521 = vmatpush1.bf16.msra.mxu0 0
        %1522 = vmatprep.subr.bf16.mxu0 0
        %1523 = vmatpush1.bf16.msra.mxu0 0
        %1524 = vmatprep.subr.bf16.mxu0 0
        %1525 = vmatpush1.bf16.msra.mxu0 0
        %1526 = vmatprep.subr.bf16.mxu0 0
        %1527 = vmatpush1.bf16.msra.mxu0 0
        %1528 = vmatprep.subr.bf16.mxu0 0
        %1529 = vmatpush1.bf16.msra.mxu0 %v1512
        %1530 = vmatprep.subr.bf16.mxu0 0
        %1531 = vmatpush2.bf16.msra.mxu0 0
        %1532 = vmatprep.subr.bf16.mxu0 0
        %1533 = vmatpush2.bf16.msra.mxu0 0
        %1534 = vmatprep.subr.bf16.mxu0 0
        %1535 = vmatpush2.bf16.msra.mxu0 0
        %1536 = vmatprep.subr.bf16.mxu0 0
        %1537 = vmatpush2.bf16.msra.mxu0 0
        %1538 = vmatprep.subr.bf16.mxu0 0
        %1539 = vmatpush2.bf16.msra.mxu0 0
        %1540 = vmatprep.subr.bf16.mxu0 0
        %1541 = vmatpush2.bf16.msra.mxu0 0
        %1542 = vmatprep.subr.bf16.mxu0 0
        %1543 = vmatpush2.bf16.msra.mxu0 0
        %1544 = vmatprep.subr.bf16.mxu0 0
        %1545 = vmatpush2.bf16.msra.mxu0 0
        %1546 = vmatprep.mubr.bf16.mxu0 0
        %1547 = vmatmul.mubr.bf16.gmra.mxu0 %v1499
        %v1548 = vpop.f32.mrf.mxu0
        %v1549 = vadd.f32 0.0, %v1548
        %v1550 = vpop.f32.mrf.mxu0
        %v1551 = vpop.f32.mrf.mxu0
        %v1552 = vadd.f32 0.0, %v1551
        %v1553 = vpop.f32.mrf.mxu0
        %1554 = vmatprep.mubr.bf16.mxu0 0
        %1555 = vmatmul.mubr.bf16.gmra.mxu0 %v1502
        %v1556 = vpop.f32.mrf.mxu0
        %v1557 = vadd.f32 0.0, %v1556
        %v1558 = vpop.f32.mrf.mxu0
        %v1559 = vpop.f32.mrf.mxu0
        %v1560 = vadd.f32 0.0, %v1559
        %v1561 = vpop.f32.mrf.mxu0
        %1562 = vmatprep.mubr.bf16.mxu0 0
        %1563 = vmatmul.mubr.bf16.gmra.mxu0 %v1505
        %v1564 = vpop.f32.mrf.mxu0
        %v1565 = vadd.f32 0.0, %v1564
        %v1566 = vpop.f32.mrf.mxu0
        %v1567 = vpop.f32.mrf.mxu0
        %v1568 = vadd.f32 0.0, %v1567
        %v1569 = vpop.f32.mrf.mxu0
        %1570 = vmatprep.mubr.bf16.mxu0 0
        %1571 = vmatmul.mubr.bf16.gmra.mxu0 %v1508
        %v1572 = vpop.f32.mrf.mxu0
        %v1573 = vadd.f32 0.0, %v1572
        %v1574 = vpop.f32.mrf.mxu0
        %v1575 = vpop.f32.mrf.mxu0
        %v1576 = vadd.f32 0.0, %v1575
        %v1577 = vpop.f32.mrf.mxu0
        %1578 = vdwg.mxu0
        %v1580 = vsel %vm1497, %v1486, 0
        %v1583 = vsel %vm1497, %v1487, 0
        %v1586 = vsel %vm1497, %v1488, 0
        %v1589 = vsel %vm1497, %v1489, 0
        %v1592 = vsel %vm1510, %v1490, 0
        %1594 = vmatprep.subr.bf16.mxu0 0
        %1595 = vmatpush1.bf16.msra.mxu0 0
        %1596 = vmatprep.subr.bf16.mxu0 0
        %1597 = vmatpush1.bf16.msra.mxu0 0
        %1598 = vmatprep.subr.bf16.mxu0 0
        %1599 = vmatpush1.bf16.msra.mxu0 0
        %1600 = vmatprep.subr.bf16.mxu0 0
        %1601 = vmatpush1.bf16.msra.mxu0 0
        %1602 = vmatprep.subr.bf16.mxu0 0
        %1603 = vmatpush1.bf16.msra.mxu0 0
        %1604 = vmatprep.subr.bf16.mxu0 0
        %1605 = vmatpush1.bf16.msra.mxu0 0
        %1606 = vmatprep.subr.bf16.mxu0 0
        %1607 = vmatpush1.bf16.msra.mxu0 0
        %1608 = vmatprep.subr.bf16.mxu0 0
        %1609 = vmatpush1.bf16.msra.mxu0 %v1592
        %1610 = vmatprep.subr.bf16.mxu0 0
        %1611 = vmatpush2.bf16.msra.mxu0 0
        %1612 = vmatprep.subr.bf16.mxu0 0
        %1613 = vmatpush2.bf16.msra.mxu0 0
        %1614 = vmatprep.subr.bf16.mxu0 0
        %1615 = vmatpush2.bf16.msra.mxu0 0
        %1616 = vmatprep.subr.bf16.mxu0 0
        %1617 = vmatpush2.bf16.msra.mxu0 0
        %1618 = vmatprep.subr.bf16.mxu0 0
        %1619 = vmatpush2.bf16.msra.mxu0 0
        %1620 = vmatprep.subr.bf16.mxu0 0
        %1621 = vmatpush2.bf16.msra.mxu0 0
        %1622 = vmatprep.subr.bf16.mxu0 0
        %1623 = vmatpush2.bf16.msra.mxu0 0
        %1624 = vmatprep.subr.bf16.mxu0 0
        %1625 = vmatpush2.bf16.msra.mxu0 0
        %1626 = vmatprep.mubr.bf16.mxu0 0
        %1627 = vmatmul.mubr.bf16.gmra.mxu0 %v1580
        %v1628 = vpop.f32.mrf.mxu0
        %v1629 = vadd.f32 %v1549, %v1628
        %v1630 = vpop.f32.mrf.mxu0
        %v1631 = vpop.f32.mrf.mxu0
        %v1632 = vadd.f32 %v1552, %v1631
        %v1633 = vpop.f32.mrf.mxu0
        %1634 = vmatprep.mubr.bf16.mxu0 0
        %1635 = vmatmul.mubr.bf16.gmra.mxu0 %v1583
        %v1636 = vpop.f32.mrf.mxu0
        %v1637 = vadd.f32 %v1557, %v1636
        %v1638 = vpop.f32.mrf.mxu0
        %v1639 = vpop.f32.mrf.mxu0
        %v1640 = vadd.f32 %v1560, %v1639
        %v1641 = vpop.f32.mrf.mxu0
        %1642 = vmatprep.mubr.bf16.mxu0 0
        %1643 = vmatmul.mubr.bf16.gmra.mxu0 %v1586
        %v1644 = vpop.f32.mrf.mxu0
        %v1645 = vadd.f32 %v1565, %v1644
        %v1646 = vpop.f32.mrf.mxu0
        %v1647 = vpop.f32.mrf.mxu0
        %v1648 = vadd.f32 %v1568, %v1647
        %v1649 = vpop.f32.mrf.mxu0
        %1650 = vmatprep.mubr.bf16.mxu0 0
        %1651 = vmatmul.mubr.bf16.gmra.mxu0 %v1589
        %v1652 = vpop.f32.mrf.mxu0
        %v1653 = vadd.f32 %v1573, %v1652
        %v1654 = vpop.f32.mrf.mxu0
        %v1655 = vpop.f32.mrf.mxu0
        %v1656 = vadd.f32 %v1576, %v1655
        %v1657 = vpop.f32.mrf.mxu0
        %1658 = vdwg.mxu0
        %vm1675 = vcmask 1046528
        %v1676 = vrot.slane %v805, 1
        %v1677 = vrot.slane %v806, 1
        %v1678 = vsel %vm1675, %v1676, %v1677
        %v1679 = vrot.slane %v807, 1
        %v1680 = vrot.slane %v808, 1
        %v1681 = vsel %vm1675, %v1679, %v1680
        %v1682 = vrot.slane %v809, 1
        %v1683 = vrot.slane %v810, 1
        %v1684 = vsel %vm1675, %v1682, %v1683
        %v1685 = vrot.slane %v811, 1
        %v1686 = vrot.slane %v812, 1
        %v1687 = vsel %vm1675, %v1685, %v1686
        %v1688 = vrot.slane %v813, 1
        %v1689 = vrot.slane %v814, 1
        %v1690 = vsel %vm1675, %v1688, %v1689
        %v1691 = vrot.slane %v815, 1
        %v1692 = vrot.slane %v816, 1
        %v1693 = vsel %vm1675, %v1691, %v1692
        %v1694 = vrot.slane %v817, 1
        %v1695 = vrot.slane %v818, 1
        %v1696 = vsel %vm1675, %v1694, %v1695
        %v1697 = vrot.slane %v819, 1
        %v1698 = vrot.slane %v820, 1
        %v1699 = vsel %vm1675, %v1697, %v1698
        %v1708 = vpack.c.bf16 %v1681, %v1678
        %v1709 = vpack.c.bf16 %v1687, %v1684
        %v1710 = vpack.c.bf16 %v1693, %v1690
        %v1711 = vpack.c.bf16 %v1699, %v1696
        %s1712 = scalar_lea.vmem %s7, 4
        %v1713 = vld [vmem:[%s1712] sm:$0x3]
        %v1715 = vsel %vm1497, %v1708, 0
        %v1718 = vsel %vm1497, %v1709, 0
        %v1721 = vsel %vm1497, %v1710, 0
        %v1724 = vsel %vm1497, %v1711, 0
        %v1727 = vsel %vm1510, %v1713, 0
        %1729 = vmatprep.subr.bf16.mxu0 0
        %1730 = vmatpush1.bf16.msra.mxu0 0
        %1731 = vmatprep.subr.bf16.mxu0 0
        %1732 = vmatpush1.bf16.msra.mxu0 0
        %1733 = vmatprep.subr.bf16.mxu0 0
        %1734 = vmatpush1.bf16.msra.mxu0 0
        %1735 = vmatprep.subr.bf16.mxu0 0
        %1736 = vmatpush1.bf16.msra.mxu0 0
        %1737 = vmatprep.subr.bf16.mxu0 0
        %1738 = vmatpush1.bf16.msra.mxu0 0
        %1739 = vmatprep.subr.bf16.mxu0 0
        %1740 = vmatpush1.bf16.msra.mxu0 0
        %1741 = vmatprep.subr.bf16.mxu0 0
        %1742 = vmatpush1.bf16.msra.mxu0 0
        %1743 = vmatprep.subr.bf16.mxu0 0
        %1744 = vmatpush1.bf16.msra.mxu0 %v1727
        %1745 = vmatprep.subr.bf16.mxu0 0
        %1746 = vmatpush2.bf16.msra.mxu0 0
        %1747 = vmatprep.subr.bf16.mxu0 0
        %1748 = vmatpush2.bf16.msra.mxu0 0
        %1749 = vmatprep.subr.bf16.mxu0 0
        %1750 = vmatpush2.bf16.msra.mxu0 0
        %1751 = vmatprep.subr.bf16.mxu0 0
        %1752 = vmatpush2.bf16.msra.mxu0 0
        %1753 = vmatprep.subr.bf16.mxu0 0
        %1754 = vmatpush2.bf16.msra.mxu0 0
        %1755 = vmatprep.subr.bf16.mxu0 0
        %1756 = vmatpush2.bf16.msra.mxu0 0
        %1757 = vmatprep.subr.bf16.mxu0 0
        %1758 = vmatpush2.bf16.msra.mxu0 0
        %1759 = vmatprep.subr.bf16.mxu0 0
        %1760 = vmatpush2.bf16.msra.mxu0 0
        %1761 = vmatprep.mubr.bf16.mxu0 0
        %1762 = vmatmul.mubr.bf16.gmra.mxu0 %v1715
        %v1763 = vpop.f32.mrf.mxu0
        %v1764 = vadd.f32 0.0, %v1763
        %v1765 = vpop.f32.mrf.mxu0
        %v1766 = vpop.f32.mrf.mxu0
        %v1767 = vadd.f32 0.0, %v1766
        %v1768 = vpop.f32.mrf.mxu0
        %1769 = vmatprep.mubr.bf16.mxu0 0
        %1770 = vmatmul.mubr.bf16.gmra.mxu0 %v1718
        %v1771 = vpop.f32.mrf.mxu0
        %v1772 = vadd.f32 0.0, %v1771
        %v1773 = vpop.f32.mrf.mxu0
        %v1774 = vpop.f32.mrf.mxu0
        %v1775 = vadd.f32 0.0, %v1774
        %v1776 = vpop.f32.mrf.mxu0
        %1777 = vmatprep.mubr.bf16.mxu0 0
        %1778 = vmatmul.mubr.bf16.gmra.mxu0 %v1721
        %v1779 = vpop.f32.mrf.mxu0
        %v1780 = vadd.f32 0.0, %v1779
        %v1781 = vpop.f32.mrf.mxu0
        %v1782 = vpop.f32.mrf.mxu0
        %v1783 = vadd.f32 0.0, %v1782
        %v1784 = vpop.f32.mrf.mxu0
        %1785 = vmatprep.mubr.bf16.mxu0 0
        %1786 = vmatmul.mubr.bf16.gmra.mxu0 %v1724
        %v1787 = vpop.f32.mrf.mxu0
        %v1788 = vadd.f32 0.0, %v1787
        %v1789 = vpop.f32.mrf.mxu0
        %v1790 = vpop.f32.mrf.mxu0
        %v1791 = vadd.f32 0.0, %v1790
        %v1792 = vpop.f32.mrf.mxu0
        %1793 = vdwg.mxu0
        %v1794 = vadd.f32 %v1629, %v1764
        %v1795 = vadd.f32 %v1632, %v1767
        %v1796 = vadd.f32 %v1637, %v1772
        %v1797 = vadd.f32 %v1640, %v1775
        %v1798 = vadd.f32 %v1645, %v1780
        %v1799 = vadd.f32 %v1648, %v1783
        %v1800 = vadd.f32 %v1653, %v1788
        %v1801 = vadd.f32 %v1656, %v1791
        %v1802 = vpack.c.bf16 %v1263, %v1261
        %v1803 = vpack.c.bf16 %v1267, %v1265
        %v1804 = vpack.c.bf16 %v1271, %v1269
        %v1805 = vpack.c.bf16 %v1275, %v1273
        %s1806 = scalar_lea.vmem %s7, 6
        %v1807 = vld [vmem:[%s1806] sm:$0x3]
        %v1809 = vsel %vm1497, %v1802, 0
        %v1812 = vsel %vm1497, %v1803, 0
        %v1815 = vsel %vm1497, %v1804, 0
        %v1818 = vsel %vm1497, %v1805, 0
        %v1821 = vsel %vm1510, %v1807, 0
        %1823 = vmatprep.subr.bf16.mxu0 0
        %1824 = vmatpush1.bf16.msra.mxu0 0
        %1825 = vmatprep.subr.bf16.mxu0 0
        %1826 = vmatpush1.bf16.msra.mxu0 0
        %1827 = vmatprep.subr.bf16.mxu0 0
        %1828 = vmatpush1.bf16.msra.mxu0 0
        %1829 = vmatprep.subr.bf16.mxu0 0
        %1830 = vmatpush1.bf16.msra.mxu0 0
        %1831 = vmatprep.subr.bf16.mxu0 0
        %1832 = vmatpush1.bf16.msra.mxu0 0
        %1833 = vmatprep.subr.bf16.mxu0 0
        %1834 = vmatpush1.bf16.msra.mxu0 0
        %1835 = vmatprep.subr.bf16.mxu0 0
        %1836 = vmatpush1.bf16.msra.mxu0 0
        %1837 = vmatprep.subr.bf16.mxu0 0
        %1838 = vmatpush1.bf16.msra.mxu0 %v1821
        %1839 = vmatprep.subr.bf16.mxu0 0
        %1840 = vmatpush2.bf16.msra.mxu0 0
        %1841 = vmatprep.subr.bf16.mxu0 0
        %1842 = vmatpush2.bf16.msra.mxu0 0
        %1843 = vmatprep.subr.bf16.mxu0 0
        %1844 = vmatpush2.bf16.msra.mxu0 0
        %1845 = vmatprep.subr.bf16.mxu0 0
        %1846 = vmatpush2.bf16.msra.mxu0 0
        %1847 = vmatprep.subr.bf16.mxu0 0
        %1848 = vmatpush2.bf16.msra.mxu0 0
        %1849 = vmatprep.subr.bf16.mxu0 0
        %1850 = vmatpush2.bf16.msra.mxu0 0
        %1851 = vmatprep.subr.bf16.mxu0 0
        %1852 = vmatpush2.bf16.msra.mxu0 0
        %1853 = vmatprep.subr.bf16.mxu0 0
        %1854 = vmatpush2.bf16.msra.mxu0 0
        %1855 = vmatprep.mubr.bf16.mxu0 0
        %1856 = vmatmul.mubr.bf16.gmra.mxu0 %v1809
        %v1857 = vpop.f32.mrf.mxu0
        %v1858 = vadd.f32 0.0, %v1857
        %v1859 = vpop.f32.mrf.mxu0
        %v1860 = vpop.f32.mrf.mxu0
        %v1861 = vadd.f32 0.0, %v1860
        %v1862 = vpop.f32.mrf.mxu0
        %1863 = vmatprep.mubr.bf16.mxu0 0
        %1864 = vmatmul.mubr.bf16.gmra.mxu0 %v1812
        %v1865 = vpop.f32.mrf.mxu0
        %v1866 = vadd.f32 0.0, %v1865
        %v1867 = vpop.f32.mrf.mxu0
        %v1868 = vpop.f32.mrf.mxu0
        %v1869 = vadd.f32 0.0, %v1868
        %v1870 = vpop.f32.mrf.mxu0
        %1871 = vmatprep.mubr.bf16.mxu0 0
        %1872 = vmatmul.mubr.bf16.gmra.mxu0 %v1815
        %v1873 = vpop.f32.mrf.mxu0
        %v1874 = vadd.f32 0.0, %v1873
        %v1875 = vpop.f32.mrf.mxu0
        %v1876 = vpop.f32.mrf.mxu0
        %v1877 = vadd.f32 0.0, %v1876
        %v1878 = vpop.f32.mrf.mxu0
        %1879 = vmatprep.mubr.bf16.mxu0 0
        %1880 = vmatmul.mubr.bf16.gmra.mxu0 %v1818
        %v1881 = vpop.f32.mrf.mxu0
        %v1882 = vadd.f32 0.0, %v1881
        %v1883 = vpop.f32.mrf.mxu0
        %v1884 = vpop.f32.mrf.mxu0
        %v1885 = vadd.f32 0.0, %v1884
        %v1886 = vpop.f32.mrf.mxu0
        %1887 = vdwg.mxu0
        %v1888 = vadd.f32 %v1794, %v1858
        %v1889 = vadd.f32 %v1795, %v1861
        %v1890 = vadd.f32 %v1796, %v1866
        %v1891 = vadd.f32 %v1797, %v1869
        %v1892 = vadd.f32 %v1798, %v1874
        %v1893 = vadd.f32 %v1799, %v1877
        %v1894 = vadd.f32 %v1800, %v1882
        %v1895 = vadd.f32 %v1801, %v1885
        %v1896 = vpack.c.bf16 %v1479, %v1478
        %v1897 = vpack.c.bf16 %v1481, %v1480
        %v1898 = vpack.c.bf16 %v1483, %v1482
        %v1899 = vpack.c.bf16 %v1485, %v1484
        %s1900 = scalar_lea.vmem %s7, 8
        %v1901 = vld [vmem:[%s1900] sm:$0x3]
        %v1903 = vsel %vm1497, %v1896, 0
        %v1906 = vsel %vm1497, %v1897, 0
        %v1909 = vsel %vm1497, %v1898, 0
        %v1912 = vsel %vm1497, %v1899, 0
        %v1915 = vsel %vm1510, %v1901, 0
        %1917 = vmatprep.subr.bf16.mxu0 0
        %1918 = vmatpush1.bf16.msra.mxu0 0
        %1919 = vmatprep.subr.bf16.mxu0 0
        %1920 = vmatpush1.bf16.msra.mxu0 0
        %1921 = vmatprep.subr.bf16.mxu0 0
        %1922 = vmatpush1.bf16.msra.mxu0 0
        %1923 = vmatprep.subr.bf16.mxu0 0
        %1924 = vmatpush1.bf16.msra.mxu0 0
        %1925 = vmatprep.subr.bf16.mxu0 0
        %1926 = vmatpush1.bf16.msra.mxu0 0
        %1927 = vmatprep.subr.bf16.mxu0 0
        %1928 = vmatpush1.bf16.msra.mxu0 0
        %1929 = vmatprep.subr.bf16.mxu0 0
        %1930 = vmatpush1.bf16.msra.mxu0 0
        %1931 = vmatprep.subr.bf16.mxu0 0
        %1932 = vmatpush1.bf16.msra.mxu0 %v1915
        %1933 = vmatprep.subr.bf16.mxu0 0
        %1934 = vmatpush2.bf16.msra.mxu0 0
        %1935 = vmatprep.subr.bf16.mxu0 0
        %1936 = vmatpush2.bf16.msra.mxu0 0
        %1937 = vmatprep.subr.bf16.mxu0 0
        %1938 = vmatpush2.bf16.msra.mxu0 0
        %1939 = vmatprep.subr.bf16.mxu0 0
        %1940 = vmatpush2.bf16.msra.mxu0 0
        %1941 = vmatprep.subr.bf16.mxu0 0
        %1942 = vmatpush2.bf16.msra.mxu0 0
        %1943 = vmatprep.subr.bf16.mxu0 0
        %1944 = vmatpush2.bf16.msra.mxu0 0
        %1945 = vmatprep.subr.bf16.mxu0 0
        %1946 = vmatpush2.bf16.msra.mxu0 0
        %1947 = vmatprep.subr.bf16.mxu0 0
        %1948 = vmatpush2.bf16.msra.mxu0 0
        %1949 = vmatprep.mubr.bf16.mxu0 0
        %1950 = vmatmul.mubr.bf16.gmra.mxu0 %v1903
        %v1951 = vpop.f32.mrf.mxu0
        %v1952 = vadd.f32 0.0, %v1951
        %v1953 = vpop.f32.mrf.mxu0
        %v1954 = vpop.f32.mrf.mxu0
        %v1955 = vadd.f32 0.0, %v1954
        %v1956 = vpop.f32.mrf.mxu0
        %1957 = vmatprep.mubr.bf16.mxu0 0
        %1958 = vmatmul.mubr.bf16.gmra.mxu0 %v1906
        %v1959 = vpop.f32.mrf.mxu0
        %v1960 = vadd.f32 0.0, %v1959
        %v1961 = vpop.f32.mrf.mxu0
        %v1962 = vpop.f32.mrf.mxu0
        %v1963 = vadd.f32 0.0, %v1962
        %v1964 = vpop.f32.mrf.mxu0
        %1965 = vmatprep.mubr.bf16.mxu0 0
        %1966 = vmatmul.mubr.bf16.gmra.mxu0 %v1909
        %v1967 = vpop.f32.mrf.mxu0
        %v1968 = vadd.f32 0.0, %v1967
        %v1969 = vpop.f32.mrf.mxu0
        %v1970 = vpop.f32.mrf.mxu0
        %v1971 = vadd.f32 0.0, %v1970
        %v1972 = vpop.f32.mrf.mxu0
        %1973 = vmatprep.mubr.bf16.mxu0 0
        %1974 = vmatmul.mubr.bf16.gmra.mxu0 %v1912
        %v1975 = vpop.f32.mrf.mxu0
        %v1976 = vadd.f32 0.0, %v1975
        %v1977 = vpop.f32.mrf.mxu0
        %v1978 = vpop.f32.mrf.mxu0
        %v1979 = vadd.f32 0.0, %v1978
        %v1980 = vpop.f32.mrf.mxu0
        %1981 = vdwg.mxu0
        %v1982 = vadd.f32 %v1888, %v1952
        %v1983 = vadd.f32 %v1889, %v1955
        %v1984 = vadd.f32 %v1890, %v1960
        %v1985 = vadd.f32 %v1891, %v1963
        %v1986 = vadd.f32 %v1892, %v1968
        %v1987 = vadd.f32 %v1893, %v1971
        %v1988 = vadd.f32 %v1894, %v1976
        %v1989 = vadd.f32 %v1895, %v1979
        %v2006 = vrot.slane %v1261, 1
        %v2007 = vrot.slane %v1262, 1
        %v2008 = vsel %vm1675, %v2006, %v2007
        %v2009 = vrot.slane %v1263, 1
        %v2010 = vrot.slane %v1264, 1
        %v2011 = vsel %vm1675, %v2009, %v2010
        %v2012 = vrot.slane %v1265, 1
        %v2013 = vrot.slane %v1266, 1
        %v2014 = vsel %vm1675, %v2012, %v2013
        %v2015 = vrot.slane %v1267, 1
        %v2016 = vrot.slane %v1268, 1
        %v2017 = vsel %vm1675, %v2015, %v2016
        %v2018 = vrot.slane %v1269, 1
        %v2019 = vrot.slane %v1270, 1
        %v2020 = vsel %vm1675, %v2018, %v2019
        %v2021 = vrot.slane %v1271, 1
        %v2022 = vrot.slane %v1272, 1
        %v2023 = vsel %vm1675, %v2021, %v2022
        %v2024 = vrot.slane %v1273, 1
        %v2025 = vrot.slane %v1274, 1
        %v2026 = vsel %vm1675, %v2024, %v2025
        %v2027 = vrot.slane %v1275, 1
        %v2028 = vrot.slane %v1276, 1
        %v2029 = vsel %vm1675, %v2027, %v2028
        %v2038 = vpack.c.bf16 %v2011, %v2008
        %v2039 = vpack.c.bf16 %v2017, %v2014
        %v2040 = vpack.c.bf16 %v2023, %v2020
        %v2041 = vpack.c.bf16 %v2029, %v2026
        %s2042 = scalar_lea.vmem %s7, 10
        %v2043 = vld [vmem:[%s2042] sm:$0x3]
        %v2045 = vsel %vm1497, %v2038, 0
        %v2048 = vsel %vm1497, %v2039, 0
        %v2051 = vsel %vm1497, %v2040, 0
        %v2054 = vsel %vm1497, %v2041, 0
        %v2057 = vsel %vm1510, %v2043, 0
        %2059 = vmatprep.subr.bf16.mxu0 0
        %2060 = vmatpush1.bf16.msra.mxu0 0
        %2061 = vmatprep.subr.bf16.mxu0 0
        %2062 = vmatpush1.bf16.msra.mxu0 0
        %2063 = vmatprep.subr.bf16.mxu0 0
        %2064 = vmatpush1.bf16.msra.mxu0 0
        %2065 = vmatprep.subr.bf16.mxu0 0
        %2066 = vmatpush1.bf16.msra.mxu0 0
        %2067 = vmatprep.subr.bf16.mxu0 0
        %2068 = vmatpush1.bf16.msra.mxu0 0
        %2069 = vmatprep.subr.bf16.mxu0 0
        %2070 = vmatpush1.bf16.msra.mxu0 0
        %2071 = vmatprep.subr.bf16.mxu0 0
        %2072 = vmatpush1.bf16.msra.mxu0 0
        %2073 = vmatprep.subr.bf16.mxu0 0
        %2074 = vmatpush1.bf16.msra.mxu0 %v2057
        %2075 = vmatprep.subr.bf16.mxu0 0
        %2076 = vmatpush2.bf16.msra.mxu0 0
        %2077 = vmatprep.subr.bf16.mxu0 0
        %2078 = vmatpush2.bf16.msra.mxu0 0
        %2079 = vmatprep.subr.bf16.mxu0 0
        %2080 = vmatpush2.bf16.msra.mxu0 0
        %2081 = vmatprep.subr.bf16.mxu0 0
        %2082 = vmatpush2.bf16.msra.mxu0 0
        %2083 = vmatprep.subr.bf16.mxu0 0
        %2084 = vmatpush2.bf16.msra.mxu0 0
        %2085 = vmatprep.subr.bf16.mxu0 0
        %2086 = vmatpush2.bf16.msra.mxu0 0
        %2087 = vmatprep.subr.bf16.mxu0 0
        %2088 = vmatpush2.bf16.msra.mxu0 0
        %2089 = vmatprep.subr.bf16.mxu0 0
        %2090 = vmatpush2.bf16.msra.mxu0 0
        %2091 = vmatprep.mubr.bf16.mxu0 0
        %2092 = vmatmul.mubr.bf16.gmra.mxu0 %v2045
        %v2093 = vpop.f32.mrf.mxu0
        %v2094 = vadd.f32 0.0, %v2093
        %v2095 = vpop.f32.mrf.mxu0
        %v2096 = vpop.f32.mrf.mxu0
        %v2097 = vadd.f32 0.0, %v2096
        %v2098 = vpop.f32.mrf.mxu0
        %2099 = vmatprep.mubr.bf16.mxu0 0
        %2100 = vmatmul.mubr.bf16.gmra.mxu0 %v2048
        %v2101 = vpop.f32.mrf.mxu0
        %v2102 = vadd.f32 0.0, %v2101
        %v2103 = vpop.f32.mrf.mxu0
        %v2104 = vpop.f32.mrf.mxu0
        %v2105 = vadd.f32 0.0, %v2104
        %v2106 = vpop.f32.mrf.mxu0
        %2107 = vmatprep.mubr.bf16.mxu0 0
        %2108 = vmatmul.mubr.bf16.gmra.mxu0 %v2051
        %v2109 = vpop.f32.mrf.mxu0
        %v2110 = vadd.f32 0.0, %v2109
        %v2111 = vpop.f32.mrf.mxu0
        %v2112 = vpop.f32.mrf.mxu0
        %v2113 = vadd.f32 0.0, %v2112
        %v2114 = vpop.f32.mrf.mxu0
        %2115 = vmatprep.mubr.bf16.mxu0 0
        %2116 = vmatmul.mubr.bf16.gmra.mxu0 %v2054
        %v2117 = vpop.f32.mrf.mxu0
        %v2118 = vadd.f32 0.0, %v2117
        %v2119 = vpop.f32.mrf.mxu0
        %v2120 = vpop.f32.mrf.mxu0
        %v2121 = vadd.f32 0.0, %v2120
        %v2122 = vpop.f32.mrf.mxu0
        %2123 = vdwg.mxu0
        %v2124 = vadd.f32 %v1982, %v2094
        %v2125 = vadd.f32 %v1983, %v2097
        %v2126 = vadd.f32 %v1984, %v2102
        %v2127 = vadd.f32 %v1985, %v2105
        %v2128 = vadd.f32 %v1986, %v2110
        %v2129 = vadd.f32 %v1987, %v2113
        %v2130 = vadd.f32 %v1988, %v2118
        %v2131 = vadd.f32 %v1989, %v2121
        %v2132 = vpack.c.bf16 %v809, %v807
        %v2133 = vpack.c.bf16 %v813, %v811
        %v2134 = vpack.c.bf16 %v817, %v815
        %v2135 = vpack.c.bf16 %v821, %v819
        %s2136 = scalar_lea.vmem %s7, 12
        %v2137 = vld [vmem:[%s2136] sm:$0x3]
        %v2139 = vsel %vm1497, %v2132, 0
        %v2142 = vsel %vm1497, %v2133, 0
        %v2145 = vsel %vm1497, %v2134, 0
        %v2148 = vsel %vm1497, %v2135, 0
        %v2151 = vsel %vm1510, %v2137, 0
        %2153 = vmatprep.subr.bf16.mxu0 0
        %2154 = vmatpush1.bf16.msra.mxu0 0
        %2155 = vmatprep.subr.bf16.mxu0 0
        %2156 = vmatpush1.bf16.msra.mxu0 0
        %2157 = vmatprep.subr.bf16.mxu0 0
        %2158 = vmatpush1.bf16.msra.mxu0 0
        %2159 = vmatprep.subr.bf16.mxu0 0
        %2160 = vmatpush1.bf16.msra.mxu0 0
        %2161 = vmatprep.subr.bf16.mxu0 0
        %2162 = vmatpush1.bf16.msra.mxu0 0
        %2163 = vmatprep.subr.bf16.mxu0 0
        %2164 = vmatpush1.bf16.msra.mxu0 0
        %2165 = vmatprep.subr.bf16.mxu0 0
        %2166 = vmatpush1.bf16.msra.mxu0 0
        %2167 = vmatprep.subr.bf16.mxu0 0
        %2168 = vmatpush1.bf16.msra.mxu0 %v2151
        %2169 = vmatprep.subr.bf16.mxu0 0
        %2170 = vmatpush2.bf16.msra.mxu0 0
        %2171 = vmatprep.subr.bf16.mxu0 0
        %2172 = vmatpush2.bf16.msra.mxu0 0
        %2173 = vmatprep.subr.bf16.mxu0 0
        %2174 = vmatpush2.bf16.msra.mxu0 0
        %2175 = vmatprep.subr.bf16.mxu0 0
        %2176 = vmatpush2.bf16.msra.mxu0 0
        %2177 = vmatprep.subr.bf16.mxu0 0
        %2178 = vmatpush2.bf16.msra.mxu0 0
        %2179 = vmatprep.subr.bf16.mxu0 0
        %2180 = vmatpush2.bf16.msra.mxu0 0
        %2181 = vmatprep.subr.bf16.mxu0 0
        %2182 = vmatpush2.bf16.msra.mxu0 0
        %2183 = vmatprep.subr.bf16.mxu0 0
        %2184 = vmatpush2.bf16.msra.mxu0 0
        %2185 = vmatprep.mubr.bf16.mxu0 0
        %2186 = vmatmul.mubr.bf16.gmra.mxu0 %v2139
        %v2187 = vpop.f32.mrf.mxu0
        %v2188 = vadd.f32 0.0, %v2187
        %v2189 = vpop.f32.mrf.mxu0
        %v2190 = vpop.f32.mrf.mxu0
        %v2191 = vadd.f32 0.0, %v2190
        %v2192 = vpop.f32.mrf.mxu0
        %2193 = vmatprep.mubr.bf16.mxu0 0
        %2194 = vmatmul.mubr.bf16.gmra.mxu0 %v2142
        %v2195 = vpop.f32.mrf.mxu0
        %v2196 = vadd.f32 0.0, %v2195
        %v2197 = vpop.f32.mrf.mxu0
        %v2198 = vpop.f32.mrf.mxu0
        %v2199 = vadd.f32 0.0, %v2198
        %v2200 = vpop.f32.mrf.mxu0
        %2201 = vmatprep.mubr.bf16.mxu0 0
        %2202 = vmatmul.mubr.bf16.gmra.mxu0 %v2145
        %v2203 = vpop.f32.mrf.mxu0
        %v2204 = vadd.f32 0.0, %v2203
        %v2205 = vpop.f32.mrf.mxu0
        %v2206 = vpop.f32.mrf.mxu0
        %v2207 = vadd.f32 0.0, %v2206
        %v2208 = vpop.f32.mrf.mxu0
        %2209 = vmatprep.mubr.bf16.mxu0 0
        %2210 = vmatmul.mubr.bf16.gmra.mxu0 %v2148
        %v2211 = vpop.f32.mrf.mxu0
        %v2212 = vadd.f32 0.0, %v2211
        %v2213 = vpop.f32.mrf.mxu0
        %v2214 = vpop.f32.mrf.mxu0
        %v2215 = vadd.f32 0.0, %v2214
        %v2216 = vpop.f32.mrf.mxu0
        %2217 = vdwg.mxu0
        %v2218 = vadd.f32 %v2124, %v2188
        %v2219 = vadd.f32 %v2125, %v2191
        %v2220 = vadd.f32 %v2126, %v2196
        %v2221 = vadd.f32 %v2127, %v2199
        %v2222 = vadd.f32 %v2128, %v2204
        %v2223 = vadd.f32 %v2129, %v2207
        %v2224 = vadd.f32 %v2130, %v2212
        %v2225 = vadd.f32 %v2131, %v2215
        %v2226 = vpack.c.bf16 %v1029, %v1028
        %v2227 = vpack.c.bf16 %v1031, %v1030
        %v2228 = vpack.c.bf16 %v1033, %v1032
        %v2229 = vpack.c.bf16 %v1035, %v1034
        %s2230 = scalar_lea.vmem %s7, 14
        %v2231 = vld [vmem:[%s2230] sm:$0x3]
        %v2233 = vsel %vm1497, %v2226, 0
        %v2236 = vsel %vm1497, %v2227, 0
        %v2239 = vsel %vm1497, %v2228, 0
        %v2242 = vsel %vm1497, %v2229, 0
        %v2245 = vsel %vm1510, %v2231, 0
        %2247 = vmatprep.subr.bf16.mxu0 0
        %2248 = vmatpush1.bf16.msra.mxu0 0
        %2249 = vmatprep.subr.bf16.mxu0 0
        %2250 = vmatpush1.bf16.msra.mxu0 0
        %2251 = vmatprep.subr.bf16.mxu0 0
        %2252 = vmatpush1.bf16.msra.mxu0 0
        %2253 = vmatprep.subr.bf16.mxu0 0
        %2254 = vmatpush1.bf16.msra.mxu0 0
        %2255 = vmatprep.subr.bf16.mxu0 0
        %2256 = vmatpush1.bf16.msra.mxu0 0
        %2257 = vmatprep.subr.bf16.mxu0 0
        %2258 = vmatpush1.bf16.msra.mxu0 0
        %2259 = vmatprep.subr.bf16.mxu0 0
        %2260 = vmatpush1.bf16.msra.mxu0 0
        %2261 = vmatprep.subr.bf16.mxu0 0
        %2262 = vmatpush1.bf16.msra.mxu0 %v2245
        %2263 = vmatprep.subr.bf16.mxu0 0
        %2264 = vmatpush2.bf16.msra.mxu0 0
        %2265 = vmatprep.subr.bf16.mxu0 0
        %2266 = vmatpush2.bf16.msra.mxu0 0
        %2267 = vmatprep.subr.bf16.mxu0 0
        %2268 = vmatpush2.bf16.msra.mxu0 0
        %2269 = vmatprep.subr.bf16.mxu0 0
        %2270 = vmatpush2.bf16.msra.mxu0 0
        %2271 = vmatprep.subr.bf16.mxu0 0
        %2272 = vmatpush2.bf16.msra.mxu0 0
        %2273 = vmatprep.subr.bf16.mxu0 0
        %2274 = vmatpush2.bf16.msra.mxu0 0
        %2275 = vmatprep.subr.bf16.mxu0 0
        %2276 = vmatpush2.bf16.msra.mxu0 0
        %2277 = vmatprep.subr.bf16.mxu0 0
        %2278 = vmatpush2.bf16.msra.mxu0 0
        %2279 = vmatprep.mubr.bf16.mxu0 0
        %2280 = vmatmul.mubr.bf16.gmra.mxu0 %v2233
        %v2281 = vpop.f32.mrf.mxu0
        %v2282 = vadd.f32 0.0, %v2281
        %v2283 = vpop.f32.mrf.mxu0
        %v2284 = vpop.f32.mrf.mxu0
        %v2285 = vadd.f32 0.0, %v2284
        %v2286 = vpop.f32.mrf.mxu0
        %2287 = vmatprep.mubr.bf16.mxu0 0
        %2288 = vmatmul.mubr.bf16.gmra.mxu0 %v2236
        %v2289 = vpop.f32.mrf.mxu0
        %v2290 = vadd.f32 0.0, %v2289
        %v2291 = vpop.f32.mrf.mxu0
        %v2292 = vpop.f32.mrf.mxu0
        %v2293 = vadd.f32 0.0, %v2292
        %v2294 = vpop.f32.mrf.mxu0
        %2295 = vmatprep.mubr.bf16.mxu0 0
        %2296 = vmatmul.mubr.bf16.gmra.mxu0 %v2239
        %v2297 = vpop.f32.mrf.mxu0
        %v2298 = vadd.f32 0.0, %v2297
        %v2299 = vpop.f32.mrf.mxu0
        %v2300 = vpop.f32.mrf.mxu0
        %v2301 = vadd.f32 0.0, %v2300
        %v2302 = vpop.f32.mrf.mxu0
        %2303 = vmatprep.mubr.bf16.mxu0 0
        %2304 = vmatmul.mubr.bf16.gmra.mxu0 %v2242
        %v2305 = vpop.f32.mrf.mxu0
        %v2306 = vadd.f32 0.0, %v2305
        %v2307 = vpop.f32.mrf.mxu0
        %v2308 = vpop.f32.mrf.mxu0
        %v2309 = vadd.f32 0.0, %v2308
        %v2310 = vpop.f32.mrf.mxu0
        %2311 = vdwg.mxu0
        %v2312 = vadd.f32 %v2218, %v2282
        %v2313 = vadd.f32 %v2219, %v2285
        %v2314 = vadd.f32 %v2220, %v2290
        %v2315 = vadd.f32 %v2221, %v2293
        %v2316 = vadd.f32 %v2222, %v2298
        %v2317 = vadd.f32 %v2223, %v2301
        %v2318 = vadd.f32 %v2224, %v2306
        %v2319 = vadd.f32 %v2225, %v2309
        %v2322 = vrot.slane %v821, 1
        %v2323 = vrot.slane %v822, 1
        %v2324 = vsel %vm1675, %v2322, %v2323
        %v2326 = vpack.c.bf16 %v1684, %v1681
        %v2327 = vpack.c.bf16 %v1690, %v1687
        %v2328 = vpack.c.bf16 %v1696, %v1693
        %v2329 = vpack.c.bf16 %v2324, %v1699
        %s2330 = scalar_lea.vmem %s7, 16
        %v2331 = vld [vmem:[%s2330] sm:$0x3]
        %v2333 = vsel %vm1497, %v2326, 0
        %v2336 = vsel %vm1497, %v2327, 0
        %v2339 = vsel %vm1497, %v2328, 0
        %v2342 = vsel %vm1497, %v2329, 0
        %v2345 = vsel %vm1510, %v2331, 0
        %2347 = vmatprep.subr.bf16.mxu0 0
        %2348 = vmatpush1.bf16.msra.mxu0 0
        %2349 = vmatprep.subr.bf16.mxu0 0
        %2350 = vmatpush1.bf16.msra.mxu0 0
        %2351 = vmatprep.subr.bf16.mxu0 0
        %2352 = vmatpush1.bf16.msra.mxu0 0
        %2353 = vmatprep.subr.bf16.mxu0 0
        %2354 = vmatpush1.bf16.msra.mxu0 0
        %2355 = vmatprep.subr.bf16.mxu0 0
        %2356 = vmatpush1.bf16.msra.mxu0 0
        %2357 = vmatprep.subr.bf16.mxu0 0
        %2358 = vmatpush1.bf16.msra.mxu0 0
        %2359 = vmatprep.subr.bf16.mxu0 0
        %2360 = vmatpush1.bf16.msra.mxu0 0
        %2361 = vmatprep.subr.bf16.mxu0 0
        %2362 = vmatpush1.bf16.msra.mxu0 %v2345
        %2363 = vmatprep.subr.bf16.mxu0 0
        %2364 = vmatpush2.bf16.msra.mxu0 0
        %2365 = vmatprep.subr.bf16.mxu0 0
        %2366 = vmatpush2.bf16.msra.mxu0 0
        %2367 = vmatprep.subr.bf16.mxu0 0
        %2368 = vmatpush2.bf16.msra.mxu0 0
        %2369 = vmatprep.subr.bf16.mxu0 0
        %2370 = vmatpush2.bf16.msra.mxu0 0
        %2371 = vmatprep.subr.bf16.mxu0 0
        %2372 = vmatpush2.bf16.msra.mxu0 0
        %2373 = vmatprep.subr.bf16.mxu0 0
        %2374 = vmatpush2.bf16.msra.mxu0 0
        %2375 = vmatprep.subr.bf16.mxu0 0
        %2376 = vmatpush2.bf16.msra.mxu0 0
        %2377 = vmatprep.subr.bf16.mxu0 0
        %2378 = vmatpush2.bf16.msra.mxu0 0
        %2379 = vmatprep.mubr.bf16.mxu0 0
        %2380 = vmatmul.mubr.bf16.gmra.mxu0 %v2333
        %v2381 = vpop.f32.mrf.mxu0
        %v2382 = vadd.f32 0.0, %v2381
        %v2383 = vpop.f32.mrf.mxu0
        %v2384 = vpop.f32.mrf.mxu0
        %v2385 = vadd.f32 0.0, %v2384
        %v2386 = vpop.f32.mrf.mxu0
        %2387 = vmatprep.mubr.bf16.mxu0 0
        %2388 = vmatmul.mubr.bf16.gmra.mxu0 %v2336
        %v2389 = vpop.f32.mrf.mxu0
        %v2390 = vadd.f32 0.0, %v2389
        %v2391 = vpop.f32.mrf.mxu0
        %v2392 = vpop.f32.mrf.mxu0
        %v2393 = vadd.f32 0.0, %v2392
        %v2394 = vpop.f32.mrf.mxu0
        %2395 = vmatprep.mubr.bf16.mxu0 0
        %2396 = vmatmul.mubr.bf16.gmra.mxu0 %v2339
        %v2397 = vpop.f32.mrf.mxu0
        %v2398 = vadd.f32 0.0, %v2397
        %v2399 = vpop.f32.mrf.mxu0
        %v2400 = vpop.f32.mrf.mxu0
        %v2401 = vadd.f32 0.0, %v2400
        %v2402 = vpop.f32.mrf.mxu0
        %2403 = vmatprep.mubr.bf16.mxu0 0
        %2404 = vmatmul.mubr.bf16.gmra.mxu0 %v2342
        %v2405 = vpop.f32.mrf.mxu0
        %v2406 = vadd.f32 0.0, %v2405
        %v2407 = vpop.f32.mrf.mxu0
        %v2408 = vpop.f32.mrf.mxu0
        %v2409 = vadd.f32 0.0, %v2408
        %v2410 = vpop.f32.mrf.mxu0
        %2411 = vdwg.mxu0
        %v2412 = vadd.f32 %v2312, %v2382
        %v2413 = vadd.f32 %v2313, %v2385
        %v2414 = vadd.f32 %v2314, %v2390
        %v2415 = vadd.f32 %v2315, %v2393
        %v2416 = vadd.f32 %v2316, %v2398
        %v2417 = vadd.f32 %v2317, %v2401
        %v2418 = vadd.f32 %v2318, %v2406
        %v2419 = vadd.f32 %v2319, %v2409
        %v2420 = vld [vmem:[%s8] sm:$0x1]
        %v2421 = vlaneseq
        %v2422 = vshrl.u32 %v2421, 7
        %v2423 = vsub.s32 0, %v2422
        %v2424 = vrot.slane %v2420, %v2423
        %v2425 = vmul.f32 %v2412, %v2424
        %v2426 = vmul.f32 %v2413, %v2424
        %v2427 = vmul.f32 %v2414, %v2424
        %v2428 = vmul.f32 %v2415, %v2424
        %v2429 = vmul.f32 %v2416, %v2424
        %v2430 = vmul.f32 %v2417, %v2424
        %v2431 = vmul.f32 %v2418, %v2424
        %v2432 = vmul.f32 %v2419, %v2424
        %v2433 = vld [vmem:[%s8 + $0x1] sm:$0x1]
        %v2434 = vlaneseq
        %v2435 = vshrl.u32 %v2434, 7
        %v2436 = vsub.s32 0, %v2435
        %v2437 = vrot.slane %v2433, %v2436
        %v2438 = vadd.f32 %v2425, %v2437
        %v2439 = vadd.f32 %v2426, %v2437
        %v2440 = vadd.f32 %v2427, %v2437
        %v2441 = vadd.f32 %v2428, %v2437
        %v2442 = vadd.f32 %v2429, %v2437
        %v2443 = vadd.f32 %v2430, %v2437
        %v2444 = vadd.f32 %v2431, %v2437
        %v2445 = vadd.f32 %v2432, %v2437
        %v2446 = vmax.f32 %v2438, 0.0
        %v2447 = vmax.f32 %v2439, 0.0
        %v2448 = vmax.f32 %v2440, 0.0
        %v2449 = vmax.f32 %v2441, 0.0
        %v2450 = vmax.f32 %v2442, 0.0
        %v2451 = vmax.f32 %v2443, 0.0
        %v2452 = vmax.f32 %v2444, 0.0
        %v2453 = vmax.f32 %v2445, 0.0
        %v2454 = vpack.c.bf16 %v2447, %v2446
        %v2455 = vpack.c.bf16 %v2449, %v2448
        %v2456 = vpack.c.bf16 %v2451, %v2450
        %v2457 = vpack.c.bf16 %v2453, %v2452
        %v2458 = vld [vmem:[%s9] sm:$0x3]
        %v2460 = vsel %vm1497, %v2454, 0
        %v2463 = vsel %vm1497, %v2455, 0
        %v2466 = vsel %vm1497, %v2456, 0
        %v2469 = vsel %vm1497, %v2457, 0
        %v2472 = vsel %vm1510, %v2458, 0
        %2474 = vmatprep.subr.bf16.mxu0 0
        %2475 = vmatpush1.bf16.msra.mxu0 0
        %2476 = vmatprep.subr.bf16.mxu0 0
        %2477 = vmatpush1.bf16.msra.mxu0 0
        %2478 = vmatprep.subr.bf16.mxu0 0
        %2479 = vmatpush1.bf16.msra.mxu0 0
        %2480 = vmatprep.subr.bf16.mxu0 0
        %2481 = vmatpush1.bf16.msra.mxu0 0
        %2482 = vmatprep.subr.bf16.mxu0 0
        %2483 = vmatpush1.bf16.msra.mxu0 0
        %2484 = vmatprep.subr.bf16.mxu0 0
        %2485 = vmatpush1.bf16.msra.mxu0 0
        %2486 = vmatprep.subr.bf16.mxu0 0
        %2487 = vmatpush1.bf16.msra.mxu0 0
        %2488 = vmatprep.subr.bf16.mxu0 0
        %2489 = vmatpush1.bf16.msra.mxu0 %v2472
        %2490 = vmatprep.subr.bf16.mxu0 0
        %2491 = vmatpush2.bf16.msra.mxu0 0
        %2492 = vmatprep.subr.bf16.mxu0 0
        %2493 = vmatpush2.bf16.msra.mxu0 0
        %2494 = vmatprep.subr.bf16.mxu0 0
        %2495 = vmatpush2.bf16.msra.mxu0 0
        %2496 = vmatprep.subr.bf16.mxu0 0
        %2497 = vmatpush2.bf16.msra.mxu0 0
        %2498 = vmatprep.subr.bf16.mxu0 0
        %2499 = vmatpush2.bf16.msra.mxu0 0
        %2500 = vmatprep.subr.bf16.mxu0 0
        %2501 = vmatpush2.bf16.msra.mxu0 0
        %2502 = vmatprep.subr.bf16.mxu0 0
        %2503 = vmatpush2.bf16.msra.mxu0 0
        %2504 = vmatprep.subr.bf16.mxu0 0
        %2505 = vmatpush2.bf16.msra.mxu0 0
        %2506 = vmatprep.mubr.bf16.mxu0 0
        %2507 = vmatmul.mubr.bf16.gmra.mxu0 %v2460
        %v2508 = vpop.f32.mrf.mxu0
        %v2509 = vadd.f32 0.0, %v2508
        %v2510 = vpop.f32.mrf.mxu0
        %v2511 = vpop.f32.mrf.mxu0
        %v2512 = vadd.f32 0.0, %v2511
        %v2513 = vpop.f32.mrf.mxu0
        %2514 = vmatprep.mubr.bf16.mxu0 0
        %2515 = vmatmul.mubr.bf16.gmra.mxu0 %v2463
        %v2516 = vpop.f32.mrf.mxu0
        %v2517 = vadd.f32 0.0, %v2516
        %v2518 = vpop.f32.mrf.mxu0
        %v2519 = vpop.f32.mrf.mxu0
        %v2520 = vadd.f32 0.0, %v2519
        %v2521 = vpop.f32.mrf.mxu0
        %2522 = vmatprep.mubr.bf16.mxu0 0
        %2523 = vmatmul.mubr.bf16.gmra.mxu0 %v2466
        %v2524 = vpop.f32.mrf.mxu0
        %v2525 = vadd.f32 0.0, %v2524
        %v2526 = vpop.f32.mrf.mxu0
        %v2527 = vpop.f32.mrf.mxu0
        %v2528 = vadd.f32 0.0, %v2527
        %v2529 = vpop.f32.mrf.mxu0
        %2530 = vmatprep.mubr.bf16.mxu0 0
        %2531 = vmatmul.mubr.bf16.gmra.mxu0 %v2469
        %v2532 = vpop.f32.mrf.mxu0
        %v2533 = vadd.f32 0.0, %v2532
        %v2534 = vpop.f32.mrf.mxu0
        %v2535 = vpop.f32.mrf.mxu0
        %v2536 = vadd.f32 0.0, %v2535
        %v2537 = vpop.f32.mrf.mxu0
        %2538 = vdwg.mxu0
        %v2539 = vld [vmem:[%s12] sm:$0x1]
        %v2540 = vlaneseq
        %v2541 = vshrl.u32 %v2540, 7
        %v2542 = vsub.s32 0, %v2541
        %v2543 = vrot.slane %v2539, %v2542
        %v2544 = vmul.f32 %v2509, %v2543
        %v2545 = vmul.f32 %v2512, %v2543
        %v2546 = vmul.f32 %v2517, %v2543
        %v2547 = vmul.f32 %v2520, %v2543
        %v2548 = vmul.f32 %v2525, %v2543
        %v2549 = vmul.f32 %v2528, %v2543
        %v2550 = vmul.f32 %v2533, %v2543
        %v2551 = vmul.f32 %v2536, %v2543
        %v2552 = vld [vmem:[%s12 + $0x1] sm:$0x1]
        %v2553 = vlaneseq
        %v2554 = vshrl.u32 %v2553, 7
        %v2555 = vsub.s32 0, %v2554
        %v2556 = vrot.slane %v2552, %v2555
        %v2557 = vadd.f32 %v2544, %v2556
        %v2558 = vadd.f32 %v2545, %v2556
        %v2559 = vadd.f32 %v2546, %v2556
        %v2560 = vadd.f32 %v2547, %v2556
        %v2561 = vadd.f32 %v2548, %v2556
        %v2562 = vadd.f32 %v2549, %v2556
        %v2563 = vadd.f32 %v2550, %v2556
        %v2564 = vadd.f32 %v2551, %v2556
        %v2565 = vld [vmem:[%s556] sm:$0xf]
        %v2566 = vld [vmem:[%s556 + $0x4] sm:$0xf]
        %v2567 = vld [vmem:[%s556 + $0x8] sm:$0xf]
        %v2568 = vld [vmem:[%s556 + $0xc] sm:$0xf]
        %v2569 = vld [vmem:[%s556 + $0x10] sm:$0xf]
        %v2570 = vld [vmem:[%s556 + $0x14] sm:$0xf]
        %v2571 = vld [vmem:[%s556 + $0x18] sm:$0xf]
        %v2572 = vld [vmem:[%s556 + $0x1c] sm:$0xf]
        %v2573 = vld [vmem:[%s10] sm:$0xf]
        %v2582 = vunpack.c.l.b16 %v2565
        %v2583 = vunpack.c.l.b16 %v2566
        %v2584 = vunpack.c.l.b16 %v2567
        %v2585 = vunpack.c.l.b16 %v2568
        %v2586 = vunpack.c.l.b16 %v2569
        %v2587 = vunpack.c.l.b16 %v2570
        %v2588 = vunpack.c.l.b16 %v2571
        %v2589 = vunpack.c.l.b16 %v2572
        %v2590 = vpack.c.b16 %v2583, %v2582
        %v2591 = vpack.c.b16 %v2585, %v2584
        %v2592 = vpack.c.b16 %v2587, %v2586
        %v2593 = vpack.c.b16 %v2589, %v2588
        %v2595 = vsel %vm622, %v2590, 0
        %v2598 = vsel %vm622, %v2591, 0
        %v2601 = vsel %vm622, %v2592, 0
        %v2604 = vsel %vm622, %v2593, 0
        %v2607 = vsel %vm650, %v2573, 0
        %2609 = vmatprep.subr.bf16.mxu0 0
        %2610 = vmatpush1.bf16.msra.mxu0 0
        %2611 = vmatprep.subr.bf16.mxu0 0
        %2612 = vmatpush1.bf16.msra.mxu0 0
        %2613 = vmatprep.subr.bf16.mxu0 0
        %2614 = vmatpush1.bf16.msra.mxu0 0
        %2615 = vmatprep.subr.bf16.mxu0 0
        %2616 = vmatpush1.bf16.msra.mxu0 0
        %2617 = vmatprep.subr.bf16.mxu0 0
        %2618 = vmatpush1.bf16.msra.mxu0 0
        %2619 = vmatprep.subr.bf16.mxu0 0
        %2620 = vmatpush1.bf16.msra.mxu0 0
        %2621 = vmatprep.subr.bf16.mxu0 0
        %2622 = vmatpush1.bf16.msra.mxu0 0
        %2623 = vmatprep.subr.bf16.mxu0 0
        %2624 = vmatpush1.bf16.msra.mxu0 %v2607
        %2625 = vmatprep.subr.bf16.mxu0 0
        %2626 = vmatpush2.bf16.msra.mxu0 0
        %2627 = vmatprep.subr.bf16.mxu0 0
        %2628 = vmatpush2.bf16.msra.mxu0 0
        %2629 = vmatprep.subr.bf16.mxu0 0
        %2630 = vmatpush2.bf16.msra.mxu0 0
        %2631 = vmatprep.subr.bf16.mxu0 0
        %2632 = vmatpush2.bf16.msra.mxu0 0
        %2633 = vmatprep.subr.bf16.mxu0 0
        %2634 = vmatpush2.bf16.msra.mxu0 0
        %2635 = vmatprep.subr.bf16.mxu0 0
        %2636 = vmatpush2.bf16.msra.mxu0 0
        %2637 = vmatprep.subr.bf16.mxu0 0
        %2638 = vmatpush2.bf16.msra.mxu0 0
        %2639 = vmatprep.subr.bf16.mxu0 0
        %2640 = vmatpush2.bf16.msra.mxu0 0
        %2641 = vmatprep.mubr.bf16.mxu0 0
        %2642 = vmatmul.mubr.bf16.gmra.mxu0 %v2595
        %v2643 = vpop.f32.mrf.mxu0
        %v2644 = vadd.f32 0.0, %v2643
        %v2645 = vpop.f32.mrf.mxu0
        %v2646 = vpop.f32.mrf.mxu0
        %v2647 = vadd.f32 0.0, %v2646
        %v2648 = vpop.f32.mrf.mxu0
        %2649 = vmatprep.mubr.bf16.mxu0 0
        %2650 = vmatmul.mubr.bf16.gmra.mxu0 %v2598
        %v2651 = vpop.f32.mrf.mxu0
        %v2652 = vadd.f32 0.0, %v2651
        %v2653 = vpop.f32.mrf.mxu0
        %v2654 = vpop.f32.mrf.mxu0
        %v2655 = vadd.f32 0.0, %v2654
        %v2656 = vpop.f32.mrf.mxu0
        %2657 = vmatprep.mubr.bf16.mxu0 0
        %2658 = vmatmul.mubr.bf16.gmra.mxu0 %v2601
        %v2659 = vpop.f32.mrf.mxu0
        %v2660 = vadd.f32 0.0, %v2659
        %v2661 = vpop.f32.mrf.mxu0
        %v2662 = vpop.f32.mrf.mxu0
        %v2663 = vadd.f32 0.0, %v2662
        %v2664 = vpop.f32.mrf.mxu0
        %2665 = vmatprep.mubr.bf16.mxu0 0
        %2666 = vmatmul.mubr.bf16.gmra.mxu0 %v2604
        %v2667 = vpop.f32.mrf.mxu0
        %v2668 = vadd.f32 0.0, %v2667
        %v2669 = vpop.f32.mrf.mxu0
        %v2670 = vpop.f32.mrf.mxu0
        %v2671 = vadd.f32 0.0, %v2670
        %v2672 = vpop.f32.mrf.mxu0
        %2673 = vdwg.mxu0
        %v2674 = vld [vmem:[%s11] sm:$0x1]
        %v2675 = vlaneseq
        %v2676 = vshrl.u32 %v2675, 7
        %v2677 = vsub.s32 0, %v2676
        %v2678 = vrot.slane %v2674, %v2677
        %v2679 = vmul.f32 %v2644, %v2678
        %v2680 = vmul.f32 %v2647, %v2678
        %v2681 = vmul.f32 %v2652, %v2678
        %v2682 = vmul.f32 %v2655, %v2678
        %v2683 = vmul.f32 %v2660, %v2678
        %v2684 = vmul.f32 %v2663, %v2678
        %v2685 = vmul.f32 %v2668, %v2678
        %v2686 = vmul.f32 %v2671, %v2678
        %v2687 = vld [vmem:[%s11 + $0x1] sm:$0x1]
        %v2688 = vlaneseq
        %v2689 = vshrl.u32 %v2688, 7
        %v2690 = vsub.s32 0, %v2689
        %v2691 = vrot.slane %v2687, %v2690
        %v2692 = vadd.f32 %v2679, %v2691
        %v2693 = vadd.f32 %v2680, %v2691
        %v2694 = vadd.f32 %v2681, %v2691
        %v2695 = vadd.f32 %v2682, %v2691
        %v2696 = vadd.f32 %v2683, %v2691
        %v2697 = vadd.f32 %v2684, %v2691
        %v2698 = vadd.f32 %v2685, %v2691
        %v2699 = vadd.f32 %v2686, %v2691
        %v2700 = vadd.f32 %v2557, %v2692
        %v2701 = vadd.f32 %v2558, %v2693
        %v2702 = vadd.f32 %v2559, %v2694
        %v2703 = vadd.f32 %v2560, %v2695
        %v2704 = vadd.f32 %v2561, %v2696
        %v2705 = vadd.f32 %v2562, %v2697
        %v2706 = vadd.f32 %v2563, %v2698
        %v2707 = vadd.f32 %v2564, %v2699
        %vm2708 = vcmask 130048
        %2709 = vst.msk [vmem:[%s531] sm:$0xff] %vm2708, %v2700
        %2710 = vst.msk [vmem:[%s531 + $0x8] sm:$0xff] %vm2708, %v2701
        %2711 = vst.msk [vmem:[%s531 + $0x10] sm:$0xff] %vm2708, %v2702
        %2712 = vst.msk [vmem:[%s531 + $0x18] sm:$0xff] %vm2708, %v2703
        %2713 = vst.msk [vmem:[%s531 + $0x20] sm:$0xff] %vm2708, %v2704
        %2714 = vst.msk [vmem:[%s531 + $0x28] sm:$0xff] %vm2708, %v2705
        %2715 = vst.msk [vmem:[%s531 + $0x30] sm:$0xff] %vm2708, %v2706
        %2716 = vst.msk [vmem:[%s531 + $0x38] sm:$0xff] %vm2708, %v2707
        %v2717 = vmax.f32 %v2700, 0.0
        %v2718 = vmax.f32 %v2701, 0.0
        %v2719 = vmax.f32 %v2702, 0.0
        %v2720 = vmax.f32 %v2703, 0.0
        %v2721 = vmax.f32 %v2704, 0.0
        %v2722 = vmax.f32 %v2705, 0.0
        %v2723 = vmax.f32 %v2706, 0.0
        %v2724 = vmax.f32 %v2707, 0.0
        %v2725 = vpack.c.bf16 %v2718, %v2717
        %v2726 = vpack.c.bf16 %v2720, %v2719
        %v2727 = vpack.c.bf16 %v2722, %v2721
        %v2728 = vpack.c.bf16 %v2724, %v2723
        %v2733 = vunpack.c.l.b16 %v2725
        %v2734 = vunpack.c.h.b16 %v2725
        %v2735 = vunpack.c.l.b16 %v2726
        %v2736 = vunpack.c.h.b16 %v2726
        %v2737 = vunpack.c.l.b16 %v2727
        %v2738 = vunpack.c.h.b16 %v2727
        %v2739 = vunpack.c.l.b16 %v2728
        %v2740 = vunpack.c.h.b16 %v2728
        %v2741 = vpack.c.b16 %v2733, %v2733
        %v2742 = vpack.c.b16 %v2734, %v2734
        %v2743 = vpack.c.b16 %v2735, %v2735
        %v2744 = vpack.c.b16 %v2736, %v2736
        %v2745 = vpack.c.b16 %v2737, %v2737
        %v2746 = vpack.c.b16 %v2738, %v2738
        %v2747 = vpack.c.b16 %v2739, %v2739
        %v2748 = vpack.c.b16 %v2740, %v2740
        %vm2757 = vcmask 125952
        %2758 = vst.msk [vmem:[%s524] sm:$0xf] %vm2757, %v2741
        %2759 = vst.msk [vmem:[%s524 + $0x4] sm:$0xf] %vm2757, %v2742
        %2760 = vst.msk [vmem:[%s524 + $0x8] sm:$0xf] %vm2757, %v2743
        %2761 = vst.msk [vmem:[%s524 + $0xc] sm:$0xf] %vm2757, %v2744
        %2762 = vst.msk [vmem:[%s524 + $0x10] sm:$0xf] %vm2757, %v2745
        %2763 = vst.msk [vmem:[%s524 + $0x14] sm:$0xf] %vm2757, %v2746
        %2764 = vst.msk [vmem:[%s524 + $0x18] sm:$0xf] %vm2757, %v2747
        %2765 = vst.msk [vmem:[%s524 + $0x1c] sm:$0xf] %vm2757, %v2748
        %s2766 = sand.u32 %s338, 1
        %s2767 = scalar_lea.sflag [#allocation3], %s2766
        %s2768 = sand.u32 %s338, 1
        %s2769 = smul.addr %s2768, 32
        %s2770 = scalar_lea.vmem [#allocation2], %s2769
        %s2771 = sand.u32 %s364, 1
        %s2772 = scalar_lea.sflag [#allocation5], %s2771
        %s2773 = sand.u32 %s364, 1
        %s2774 = smul.addr %s2773, 64
        %s2775 = scalar_lea.vmem [#allocation4], %s2774
        // Predicated region
        $region73: #{bottleneck_forward.1} parent=71 // pred_check
          %p2776 = pneg %p348
        $region74: #{bottleneck_forward.1} parent=71 // pred_check_branch
          %2778 = sbr.rel (%p2776) target = $region76
        $region75: #{bottleneck_forward.1} parent=71 // pred_region
          %s2780 = ssub.s32 512, 512
          %2781 = vsyncadd %s2767, %s2780
          %s2782 = smul.addr %s32, 8
          %s2783 = smul.addr %s2782, 64
          %s2784 = scalar_lea.hbm %s13, %s2783
          %s2785 = sshll.u32 %s2770, 4
          %s2786 = int_to_ptr.vmem [resolvable:$true] %s2785
          %2791 = dma.vmem_to_hbm [thread:$0]  %s2786, 512, %s2784, %s2767, 64, 64, 4
        $region76: #{bottleneck_forward.1} parent=71 // pred_fallthru
          _
        // Predicated region
        $region77: #{bottleneck_forward.1} parent=71 // pred_check
          %p2792 = pneg %p374
        $region78: #{bottleneck_forward.1} parent=71 // pred_check_branch
          %2794 = sbr.rel (%p2792) target = $region80
        $region79: #{bottleneck_forward.1} parent=71 // pred_region
          %s2796 = ssub.s32 1024, 1024
          %2797 = vsyncadd %s2772, %s2796
          %s2798 = smul.addr %s32, 8
          %s2799 = smul.addr %s2798, 128
          %s2800 = scalar_lea.hbm %s14, %s2799
          %s2801 = sshll.u32 %s2775, 4
          %s2802 = int_to_ptr.vmem [resolvable:$true] %s2801
          %2807 = dma.vmem_to_hbm [thread:$0]  %s2802, 1024, %s2800, %s2772, 128, 128, 8
        $region80: #{bottleneck_forward.1} parent=71 // pred_fallthru
          _
      $region72: #{bottleneck_forward.1} parent=5 // pred_fallthru
        _
      %p2808 = scmp.le.s32.totalorder 2, %s27
      // Predicated region
      $region81: #{bottleneck_forward.1} parent=5 // pred_check
        %p2809 = pneg %p2808
      $region82: #{bottleneck_forward.1} parent=5 // pred_check_branch
        %2811 = sbr.rel (%p2809) target = $region84
      $region83: #{bottleneck_forward.1} parent=5 // pred_region
        %s2812 = ssub.s32 %s27, 2
        // Predicated region
        $region85: #{bottleneck_forward.1} parent=83 // pred_check
          %p2813 = pneg %p354
        $region86: #{bottleneck_forward.1} parent=83 // pred_check_branch
          %2815 = sbr.rel (%p2813) target = $region88
        $region87: #{bottleneck_forward.1} parent=83 // pred_region
          %s2816 = sand.u32 %s339, 1
          %s2817 = scalar_lea.sflag [#allocation3], %s2816
          %s2818 = sand.u32 %s339, 1
          %s2819 = smul.addr %s2818, 32
          %s2820 = scalar_lea.vmem [#allocation2], %s2819
          %2821 = dma.done %s2817, 512
        $region88: #{bottleneck_forward.1} parent=83 // pred_fallthru
          _
        // Predicated region
        $region89: #{bottleneck_forward.1} parent=83 // pred_check
          %p2822 = pneg %p380
        $region90: #{bottleneck_forward.1} parent=83 // pred_check_branch
          %2824 = sbr.rel (%p2822) target = $region92
        $region91: #{bottleneck_forward.1} parent=83 // pred_region
          %s2825 = sand.u32 %s365, 1
          %s2826 = scalar_lea.sflag [#allocation5], %s2825
          %s2827 = sand.u32 %s365, 1
          %s2828 = smul.addr %s2827, 64
          %s2829 = scalar_lea.vmem [#allocation4], %s2828
          %2830 = dma.done %s2826, 1024
        $region92: #{bottleneck_forward.1} parent=83 // pred_fallthru
          _
      $region84: #{bottleneck_forward.1} parent=5 // pred_fallthru
        _
    $region6: #{bottleneck_forward.1} parent=1 // loop_footer
      %s31 = sadd.s32 1, %s27
    $region7: #{bottleneck_forward.1} parent=1 // loop_footer_branch
      %26 = sbr.rel target = $region3
    $region8: #{bottleneck_forward.1} parent=1 // loop_exit
      _
    %2831 = vsyncpa [#allocation3], 1
    %s2832 = scalar_lea.sflag [#allocation3], 1
    %2833 = vsyncpa %s2832, 1
    %2834 = vsyncpa [#allocation5], 1
    %s2835 = scalar_lea.sflag [#allocation5], 1
    %2836 = vsyncpa %s2835, 1

</llo_original>
